<compile_context>
chip_gen: v6e
topology: v6e:2x2x1
jax: 0.10.0
libtpu: 0.0.40
codegen_flags: <defaults>
</compile_context>

<pallas_src>
import numpy as np

import jax
import jax.numpy as jnp
from jax.experimental import pallas as pl
from jax.experimental.pallas import tpu as pltpu

# ---------------- configuration (synthetic Config) ----------------
NUM_ANCHORS = 5                     # len(Config['Anchors'])
NUM_CLASSES = 20                    # len(Config['Classes'])
BOX_DIM = 5 + NUM_CLASSES           # 25 per anchor
OUT_CH = NUM_ANCHORS * BOX_DIM      # 125
LANE = 128
OUT_P = ((OUT_CH + LANE - 1) // LANE) * LANE   # 125 -> 128


def _round_up(x, m):
    return (x + m - 1) // m * m


def _cdiv(a, b):
    return (a + b - 1) // b


def _build_constants():
    """Compile-time column masks + same-anchor class matrix (numpy)."""
    idx = np.arange(OUT_P)
    anchor = idx // BOX_DIM
    within = idx % BOX_DIM
    valid = idx < OUT_CH
    is_sig = valid & ((within < 2) | (within == 4))    # x, y, objectness
    is_exp = valid & ((within == 2) | (within == 3))   # w, h
    is_cls = valid & (within >= 5)                     # class logits

    masks = np.zeros((8, OUT_P), np.float32)           # 8 sublanes for tiling
    masks[0] = is_sig
    masks[1] = is_exp
    masks[2] = is_cls
    masks[3] = ~is_cls                                 # 1.0 off-class (denom guard)

    smat = (is_cls[:, None] & is_cls[None, :] &
            (anchor[:, None] == anchor[None, :])).astype(np.float32)
    return masks, smat


_MASKS_NP, _SMAT_NP = _build_constants()


def yolov2_head_kernel(x_ref, w1_ref, b1_ref, w2_ref, b2_ref,
                       masks_ref, smat_ref, out_ref):
    """One row tile: (TM, Cin_p) bf16 -> activated predictions (TM, OUT_P) f32."""
    # Surrogate backbone pointwise conv (1x1 conv == matmul), bf16 in / f32 acc.
    h = jnp.dot(x_ref[...], w1_ref[...],
                preferred_element_type=jnp.float32) + b1_ref[...]
    h = jnp.where(h > 0, h, 0.1 * h)                   # leaky ReLU(0.1)

    # Prediction conv -> per-anchor logits, already a 128-lane slab.
    logits = jnp.dot(h.astype(jnp.bfloat16), w2_ref[...],
                     preferred_element_type=jnp.float32) + b2_ref[...]

    masks = masks_ref[...]                             # (8, OUT_P) constants
    is_sig = masks[0:1, :] > 0.5
    is_exp = masks[1:2, :] > 0.5
    is_cls = masks[2:3, :] > 0.5
    not_cls = masks[3:4, :]                            # f32 guard for denom

    # Single masked row-max over ALL class columns (softmax is shift-invariant,
    # so one shared max is still correct per anchor). 1 XLU reduction.
    m_cls = jnp.max(jnp.where(is_cls, logits, -1e30), axis=-1, keepdims=True)
    shift = jnp.where(is_cls, m_cls, 0.0)              # 0 on non-class columns

    # ONE full-width exp feeds sigmoid, exp(wh) and the softmax numerators.
    e = jnp.exp(logits - shift)

    # sigmoid(x) = 1 - 1/(1+exp(x))  (exp-overflow safe form).
    sig = 1.0 - pl.reciprocal(1.0 + e, approx=True)

    # Per-anchor softmax denominator broadcast to every class column via one
    # small MXU matmul against the constant same-anchor indicator matrix.
    denom = jnp.dot(e, smat_ref[...],
                    preferred_element_type=jnp.float32) + not_cls
    cls = e * pl.reciprocal(denom, approx=True)

    # Single lane-dense store of the fused, activated prediction slab.
    out_ref[...] = jnp.where(is_sig, sig,
                             jnp.where(is_exp, e,
                                       jnp.where(is_cls, cls, 0.0)))


def yolov2_forward(x_nchw, w1, b1, w2, b2, *, tm=512, num_tensorcores=1):
    """x_nchw: (B, Cin, H, W) float32 feature map. Returns (bbox, iou, score)."""
    B, Cin, H, W = x_nchw.shape
    Ch = w1.shape[1]
    A, K = NUM_ANCHORS, NUM_CLASSES

    cin_p = _round_up(Cin, LANE)
    ch_p = _round_up(Ch, LANE)
    out_p = OUT_P

    # NCHW -> NHWC -> flatten rows (matches permute(0,2,3,1).reshape(B,-1,...)).
    x_rows = jnp.transpose(x_nchw, (0, 2, 3, 1)).reshape(B * H * W, Cin)
    rows = B * H * W

    # Single-TC chips (v5e/v6e): keep the full tile (bigger streaming tiles win,
    # per-step overhead is pure cost). v7x: pass num_tensorcores=2 to split the
    # row grid into an even number of steps so both TensorCores are fed.
    tm = max(8, min(tm, _round_up(rows, 8)))
    if num_tensorcores > 1 and rows >= 16 * num_tensorcores:
        steps = _round_up(max(num_tensorcores, _cdiv(rows, tm)), num_tensorcores)
        tm = _round_up(_cdiv(rows, steps), 8)
    rows_p = _round_up(rows, tm)

    # Pad only when needed (avoid an extra HBM copy when already aligned), then
    # cast streamed operands to bf16 for the MXU (accumulation stays f32).
    if rows_p != rows or cin_p != Cin:
        x_rows = jnp.pad(x_rows, ((0, rows_p - rows), (0, cin_p - Cin)))
    x_pad = x_rows.astype(jnp.bfloat16)

    if cin_p != Cin or ch_p != Ch:
        w1 = jnp.pad(w1, ((0, cin_p - Cin), (0, ch_p - Ch)))
    if ch_p != Ch:
        b1 = jnp.pad(b1, ((0, 0), (0, ch_p - Ch)))
        w2 = jnp.pad(w2, ((0, ch_p - Ch), (0, 0)))
    if out_p != OUT_CH:
        w2 = jnp.pad(w2, ((0, 0), (0, out_p - OUT_CH)))
        b2 = jnp.pad(b2, ((0, 0), (0, out_p - OUT_CH)))
    w1_p = w1.astype(jnp.bfloat16)
    w2_p = w2.astype(jnp.bfloat16)
    b1_p = b1.astype(jnp.float32)
    b2_p = b2.astype(jnp.float32)

    masks = jnp.asarray(_MASKS_NP)
    smat = jnp.asarray(_SMAT_NP)

    grid = (rows_p // tm,)

    out_flat = pl.pallas_call(
        yolov2_head_kernel,
        out_shape=jax.ShapeDtypeStruct((rows_p, out_p), jnp.float32),
        grid=grid,
        in_specs=[
            pl.BlockSpec((tm, cin_p), lambda i: (i, 0)),
            pl.BlockSpec((cin_p, ch_p), lambda i: (0, 0)),
            pl.BlockSpec((1, ch_p), lambda i: (0, 0)),
            pl.BlockSpec((ch_p, out_p), lambda i: (0, 0)),
            pl.BlockSpec((1, out_p), lambda i: (0, 0)),
            pl.BlockSpec((8, out_p), lambda i: (0, 0)),
            pl.BlockSpec((out_p, out_p), lambda i: (0, 0)),
        ],
        out_specs=pl.BlockSpec((tm, out_p), lambda i: (i, 0)),
        compiler_params=pltpu.CompilerParams(
            dimension_semantics=("parallel",),
            vmem_limit_bytes=32 * 1024 * 1024,
        ),
    )(x_pad, w1_p, b1_p, w2_p, b2_p, masks, smat)

    # Split / reshape in plain JAX (activations already applied in-kernel).
    pred = out_flat[:rows, :OUT_CH].reshape(B, H * W, A, 5 + K)
    bbox_pred = pred[..., 0:4]
    iou_pred = pred[..., 4:5]
    score_pred = pred[..., 5:]
    return bbox_pred, iou_pred, score_pred


def _reference(x_nchw, w1, b1, w2, b2):
    B, Cin, H, W = x_nchw.shape
    A, K = NUM_ANCHORS, NUM_CLASSES
    x_rows = jnp.transpose(x_nchw, (0, 2, 3, 1)).reshape(B * H * W, Cin)
    h = jnp.dot(x_rows, w1, precision=jax.lax.Precision.HIGHEST) + b1
    h = jnp.where(h > 0, h, 0.1 * h)
    logits = jnp.dot(h, w2, precision=jax.lax.Precision.HIGHEST) + b2
    pred = logits.reshape(B, H * W, A, 5 + K)
    xy = jax.nn.sigmoid(pred[..., :2])
    wh = jnp.exp(pred[..., 2:4])
    bbox = jnp.concatenate([xy, wh], axis=-1)
    iou = jax.nn.sigmoid(pred[..., 4:5])
    score = jax.nn.softmax(pred[..., 5:], axis=-1)
    return bbox, iou, score


if __name__ == "__main__":
    B, Cin, H, W = 2, 4, 16, 16     # small synthetic feature map (stand-in for DarkNet19 output)
    Ch = 32                         # hidden channels of the surrogate backbone layer

    key = jax.random.PRNGKey(0)
    kx, k1, k2, k3, k4 = jax.random.split(key, 5)
    x = jax.random.normal(kx, (B, Cin, H, W), dtype=jnp.float32)
    w1 = 0.1 * jax.random.normal(k1, (Cin, Ch), dtype=jnp.float32)
    b1 = 0.1 * jax.random.normal(k2, (1, Ch), dtype=jnp.float32)
    w2 = 0.1 * jax.random.normal(k3, (Ch, OUT_CH), dtype=jnp.float32)
    b2 = 0.1 * jax.random.normal(k4, (1, OUT_CH), dtype=jnp.float32)

    bbox, iou, score = yolov2_forward(x, w1, b1, w2, b2)
    jax.block_until_ready((bbox, iou, score))

    rb, ri, rs = _reference(x, w1, b1, w2, b2)
    assert bbox.shape == (B, H * W, NUM_ANCHORS, 4)
    assert iou.shape == (B, H * W, NUM_ANCHORS, 1)
    assert score.shape == (B, H * W, NUM_ANCHORS, NUM_CLASSES)
    assert jnp.allclose(bbox, rb, atol=1e-2, rtol=1e-2)
    assert jnp.allclose(iou, ri, atol=1e-2, rtol=1e-2)
    assert jnp.allclose(score, rs, atol=1e-2, rtol=1e-2)

    print("KERNEL_OK")
</pallas_src>

<mosaic_0001>
module attributes {stable_mosaic.version = 11 : i64} {
  func.func @yolov2_head_kernel(%arg0: i32, %arg1: memref<512x128xbf16, #tpu.memory_space<vmem>>, %arg2: memref<128x128xbf16, #tpu.memory_space<vmem>>, %arg3: memref<1x128xf32, #tpu.memory_space<vmem>>, %arg4: memref<128x128xbf16, #tpu.memory_space<vmem>>, %arg5: memref<1x128xf32, #tpu.memory_space<vmem>>, %arg6: memref<8x128xf32, #tpu.memory_space<vmem>>, %arg7: memref<128x128xf32, #tpu.memory_space<vmem>>, %arg8: memref<512x128xf32, #tpu.memory_space<vmem>>) attributes {dimension_semantics = [#tpu.dimension_semantics<parallel>], iteration_bounds = array<i64: 1>, scalar_prefetch = 0 : i64, scratch_operands = 0 : i64, tpu.core_type = #tpu.core_type<tc>, window_params = [{transform_indices = @transform_0, window_bounds = array<i64: 512, 128>}, {pipeline_mode = #tpu.pipeline_mode<synchronous>, transform_indices = @transform_1, window_bounds = array<i64: 128, 128>}, {pipeline_mode = #tpu.pipeline_mode<synchronous>, transform_indices = @transform_2, window_bounds = array<i64: 1, 128>}, {pipeline_mode = #tpu.pipeline_mode<synchronous>, transform_indices = @transform_3, window_bounds = array<i64: 128, 128>}, {pipeline_mode = #tpu.pipeline_mode<synchronous>, transform_indices = @transform_4, window_bounds = array<i64: 1, 128>}, {pipeline_mode = #tpu.pipeline_mode<synchronous>, transform_indices = @transform_5, window_bounds = array<i64: 8, 128>}, {pipeline_mode = #tpu.pipeline_mode<synchronous>, transform_indices = @transform_6, window_bounds = array<i64: 128, 128>}, {transform_indices = @transform_7, window_bounds = array<i64: 512, 128>}]} {
    %c0 = arith.constant 0 : index
    %c0_0 = arith.constant 0 : index
    %0 = vector.load %arg1[%c0, %c0_0] : memref<512x128xbf16, #tpu.memory_space<vmem>>, vector<512x128xbf16>
    %c0_1 = arith.constant 0 : index
    %c0_2 = arith.constant 0 : index
    %1 = vector.load %arg2[%c0_1, %c0_2] : memref<128x128xbf16, #tpu.memory_space<vmem>>, vector<128x128xbf16>
    %cst = arith.constant dense<0.000000e+00> : vector<512x128xf32>
    %2 = tpu.matmul %0, %1, %cst {dimension_numbers = #tpu.dot_dimension_numbers<[1], [0], [0], [1], [0, 0, 1, 1], [], []>} : vector<512x128xbf16>, vector<128x128xbf16>, vector<512x128xf32> -> vector<512x128xf32>
    %c0_3 = arith.constant 0 : index
    %c0_4 = arith.constant 0 : index
    %3 = vector.load %arg3[%c0_3, %c0_4] : memref<1x128xf32, #tpu.memory_space<vmem>>, vector<1x128xf32>
    %4 = vector.broadcast %3 : vector<1x128xf32> to vector<512x128xf32>
    %5 = arith.addf %2, %4 : vector<512x128xf32>
    %cst_5 = arith.constant 0.000000e+00 : f32
    %6 = vector.broadcast %cst_5 : f32 to vector<512x128xf32>
    %7 = arith.cmpf ogt, %5, %6 : vector<512x128xf32>
    %cst_6 = arith.constant 1.000000e-01 : f32
    %8 = vector.broadcast %cst_6 : f32 to vector<512x128xf32>
    %9 = arith.mulf %8, %5 : vector<512x128xf32>
    %10 = arith.select %7, %5, %9 : vector<512x128xi1>, vector<512x128xf32>
    %11 = arith.truncf %10 : vector<512x128xf32> to vector<512x128xbf16>
    %c0_7 = arith.constant 0 : index
    %c0_8 = arith.constant 0 : index
    %12 = vector.load %arg4[%c0_7, %c0_8] : memref<128x128xbf16, #tpu.memory_space<vmem>>, vector<128x128xbf16>
    %cst_9 = arith.constant dense<0.000000e+00> : vector<512x128xf32>
    %13 = tpu.matmul %11, %12, %cst_9 {dimension_numbers = #tpu.dot_dimension_numbers<[1], [0], [0], [1], [0, 0, 1, 1], [], []>} : vector<512x128xbf16>, vector<128x128xbf16>, vector<512x128xf32> -> vector<512x128xf32>
    %c0_10 = arith.constant 0 : index
    %c0_11 = arith.constant 0 : index
    %14 = vector.load %arg5[%c0_10, %c0_11] : memref<1x128xf32, #tpu.memory_space<vmem>>, vector<1x128xf32>
    %15 = vector.broadcast %14 : vector<1x128xf32> to vector<512x128xf32>
    %16 = arith.addf %13, %15 : vector<512x128xf32>
    %c0_12 = arith.constant 0 : index
    %c0_13 = arith.constant 0 : index
    %17 = vector.load %arg6[%c0_12, %c0_13] : memref<8x128xf32, #tpu.memory_space<vmem>>, vector<8x128xf32>
    %18 = vector.extract_strided_slice %17 {offsets = [0, 0], sizes = [1, 128], strides = [1, 1]} : vector<8x128xf32> to vector<1x128xf32>
    %cst_14 = arith.constant 5.000000e-01 : f32
    %19 = vector.broadcast %cst_14 : f32 to vector<1x128xf32>
    %20 = arith.cmpf ogt, %18, %19 : vector<1x128xf32>
    %21 = vector.extract_strided_slice %17 {offsets = [1, 0], sizes = [1, 128], strides = [1, 1]} : vector<8x128xf32> to vector<1x128xf32>
    %cst_15 = arith.constant 5.000000e-01 : f32
    %22 = vector.broadcast %cst_15 : f32 to vector<1x128xf32>
    %23 = arith.cmpf ogt, %21, %22 : vector<1x128xf32>
    %24 = vector.extract_strided_slice %17 {offsets = [2, 0], sizes = [1, 128], strides = [1, 1]} : vector<8x128xf32> to vector<1x128xf32>
    %cst_16 = arith.constant 5.000000e-01 : f32
    %25 = vector.broadcast %cst_16 : f32 to vector<1x128xf32>
    %26 = arith.cmpf ogt, %24, %25 : vector<1x128xf32>
    %27 = vector.extract_strided_slice %17 {offsets = [3, 0], sizes = [1, 128], strides = [1, 1]} : vector<8x128xf32> to vector<1x128xf32>
    %cst_17 = arith.constant -1.000000e+30 : f32
    %28 = vector.shape_cast %26 : vector<1x128xi1> to vector<1x128xi1>
    %29 = vector.broadcast %28 : vector<1x128xi1> to vector<512x128xi1>
    %30 = vector.broadcast %cst_17 : f32 to vector<512x128xf32>
    %31 = arith.select %29, %16, %30 : vector<512x128xi1>, vector<512x128xf32>
    %cst_18 = arith.constant dense<0xFF800000> : vector<512xf32>
    %32 = vector.multi_reduction <maximumf>, %31, %cst_18 [1] : vector<512x128xf32> to vector<512xf32>
    %33 = vector.shape_cast %32 : vector<512xf32> to vector<512x1xf32>
    %cst_19 = arith.constant 0.000000e+00 : f32
    %34 = vector.shape_cast %26 : vector<1x128xi1> to vector<1x128xi1>
    %35 = vector.broadcast %34 : vector<1x128xi1> to vector<512x128xi1>
    %36 = vector.shape_cast %33 : vector<512x1xf32> to vector<512x1xf32>
    %37 = vector.broadcast %36 : vector<512x1xf32> to vector<512x128xf32>
    %38 = vector.broadcast %cst_19 : f32 to vector<512x128xf32>
    %39 = arith.select %35, %37, %38 : vector<512x128xi1>, vector<512x128xf32>
    %40 = arith.subf %16, %39 : vector<512x128xf32>
    %41 = math.exp %40 : vector<512x128xf32>
    %cst_20 = arith.constant 1.000000e+00 : f32
    %42 = vector.broadcast %cst_20 : f32 to vector<512x128xf32>
    %43 = arith.addf %42, %41 : vector<512x128xf32>
    %44 = tpu.reciprocal %43 {approx = true} : vector<512x128xf32> -> vector<512x128xf32>
    %cst_21 = arith.constant 1.000000e+00 : f32
    %45 = vector.broadcast %cst_21 : f32 to vector<512x128xf32>
    %46 = arith.subf %45, %44 : vector<512x128xf32>
    %c0_22 = arith.constant 0 : index
    %c0_23 = arith.constant 0 : index
    %47 = vector.load %arg7[%c0_22, %c0_23] : memref<128x128xf32, #tpu.memory_space<vmem>>, vector<128x128xf32>
    %cst_24 = arith.constant dense<0.000000e+00> : vector<512x128xf32>
    %48 = tpu.matmul %41, %47, %cst_24 {dimension_numbers = #tpu.dot_dimension_numbers<[1], [0], [0], [1], [0, 0, 1, 1], [], []>} : vector<512x128xf32>, vector<128x128xf32>, vector<512x128xf32> -> vector<512x128xf32>
    %49 = vector.broadcast %27 : vector<1x128xf32> to vector<512x128xf32>
    %50 = arith.addf %48, %49 : vector<512x128xf32>
    %51 = tpu.reciprocal %50 {approx = true} : vector<512x128xf32> -> vector<512x128xf32>
    %52 = arith.mulf %41, %51 : vector<512x128xf32>
    %cst_25 = arith.constant 0.000000e+00 : f32
    %53 = vector.shape_cast %26 : vector<1x128xi1> to vector<1x128xi1>
    %54 = vector.broadcast %53 : vector<1x128xi1> to vector<512x128xi1>
    %55 = vector.broadcast %cst_25 : f32 to vector<512x128xf32>
    %56 = arith.select %54, %52, %55 : vector<512x128xi1>, vector<512x128xf32>
    %57 = vector.shape_cast %23 : vector<1x128xi1> to vector<1x128xi1>
    %58 = vector.broadcast %57 : vector<1x128xi1> to vector<512x128xi1>
    %59 = arith.select %58, %41, %56 : vector<512x128xi1>, vector<512x128xf32>
    %60 = vector.shape_cast %20 : vector<1x128xi1> to vector<1x128xi1>
    %61 = vector.broadcast %60 : vector<1x128xi1> to vector<512x128xi1>
    %62 = arith.select %61, %46, %59 : vector<512x128xi1>, vector<512x128xf32>
    %c0_26 = arith.constant 0 : index
    %c0_27 = arith.constant 0 : index
    %63 = vector.load %arg8[%c0_26, %c0_27] : memref<512x128xf32, #tpu.memory_space<vmem>>, vector<512x128xf32>
    tpu.vector_store %arg8[%c0_26, %c0_27], %62 {strides = array<i32>} : memref<512x128xf32, #tpu.memory_space<vmem>>, vector<512x128xf32>,
    return
  }
  func.func @transform_0(%arg0: i32) -> (i32, i32) {
    %c0_i32 = arith.constant 0 : i32
    %c0_i32_0 = arith.constant 0 : i32
    return %arg0, %c0_i32 : i32, i32
  }
  func.func @transform_1(%arg0: i32) -> (i32, i32) {
    %c0_i32 = arith.constant 0 : i32
    %c0_i32_0 = arith.constant 0 : i32
    %c0_i32_1 = arith.constant 0 : i32
    return %c0_i32, %c0_i32_0 : i32, i32
  }
  func.func @transform_2(%arg0: i32) -> (i32, i32) {
    %c0_i32 = arith.constant 0 : i32
    %c0_i32_0 = arith.constant 0 : i32
    %c0_i32_1 = arith.constant 0 : i32
    return %c0_i32, %c0_i32_0 : i32, i32
  }
  func.func @transform_3(%arg0: i32) -> (i32, i32) {
    %c0_i32 = arith.constant 0 : i32
    %c0_i32_0 = arith.constant 0 : i32
    %c0_i32_1 = arith.constant 0 : i32
    return %c0_i32, %c0_i32_0 : i32, i32
  }
  func.func @transform_4(%arg0: i32) -> (i32, i32) {
    %c0_i32 = arith.constant 0 : i32
    %c0_i32_0 = arith.constant 0 : i32
    %c0_i32_1 = arith.constant 0 : i32
    return %c0_i32, %c0_i32_0 : i32, i32
  }
  func.func @transform_5(%arg0: i32) -> (i32, i32) {
    %c0_i32 = arith.constant 0 : i32
    %c0_i32_0 = arith.constant 0 : i32
    %c0_i32_1 = arith.constant 0 : i32
    return %c0_i32, %c0_i32_0 : i32, i32
  }
  func.func @transform_6(%arg0: i32) -> (i32, i32) {
    %c0_i32 = arith.constant 0 : i32
    %c0_i32_0 = arith.constant 0 : i32
    %c0_i32_1 = arith.constant 0 : i32
    return %c0_i32, %c0_i32_0 : i32, i32
  }
  func.func @transform_7(%arg0: i32) -> (i32, i32) {
    %c0_i32 = arith.constant 0 : i32
    %c0_i32_0 = arith.constant 0 : i32
    return %arg0, %c0_i32 : i32, i32
  }
}

</mosaic_0001>

<llo_original>
// kernel: tpu_custom_call.1
$region0: #{tpu_custom_call.1}
  #allocation0 [shape = 'u32[]', space=smem, size = 0x4, offset = 0x4, fixed_abs, tag = 'smem constant byte address 0x4 - core index']
  #allocation1 [shape = 'u32[144,128]{1,0:T(1,128)}', space=vmem, size = 0x12000, scoped, tag = 'internal scratch']
  %s0 = inlined_call_operand.hbm [shape: bf16[512,128], index: 0, kind: input, shape index: {}]
  %s1 = inlined_call_operand.hbm [shape: bf16[128,128], index: 1, kind: input, shape index: {}]
  %s2 = inlined_call_operand.vmem [shape: f32[1,128], index: 2, kind: input, shape index: {}]
  %s3 = inlined_call_operand.hbm [shape: bf16[128,128], index: 3, kind: input, shape index: {}]
  %s4 = inlined_call_operand.hbm [shape: f32[1,128], index: 4, kind: input, shape index: {}]
  %s5 = inlined_call_operand.vmem [shape: f32[8,128], index: 5, kind: input, shape index: {}]
  %s6 = inlined_call_operand.hbm [shape: f32[128,128], index: 6, kind: input, shape index: {}]
  %s7 = inlined_call_operand.hbm [shape: f32[512,128], index: 7, kind: output, shape index: {}]
  %s8 = sld [smem:[#allocation0]]
  $region58: #{tpu_custom_call.1} parent=0
    _
  %s10 = ssub.s32 1, %s8
  %s11 = scalar_select 0, %s10, %s8
  $region1: #{tpu_custom_call.1} parent=0
    #allocation2 [shape = 'u8[131072]{0}', space=vmem, size = 0x20000, scoped, tag = 'input window, operand 0, single buffered']
    #allocation3 [shape = 's32[1]{0}', space=sflag, size = 0x4, scoped, tag = 'scoped memory for tpu_custom_call.1']
    #allocation4 [shape = 's32[1]{0}', space=sflag, size = 0x4, scoped, tag = 'scoped memory for tpu_custom_call.1']
    #allocation5 [shape = 'u8[32768]{0}', space=vmem, size = 0x8000, scoped, tag = 'input window, operand 1, single buffered']
    #allocation6 [shape = 's32[1]{0}', space=sflag, size = 0x4, scoped, tag = 'scoped memory for tpu_custom_call.1']
    #allocation7 [shape = 'u8[32768]{0}', space=vmem, size = 0x8000, scoped, tag = 'input window, operand 3, single buffered']
    #allocation8 [shape = 'u8[512]{0}', space=vmem, size = 0x400, scoped, tag = 'input window, operand 4, single buffered']
    #allocation9 [shape = 's32[1]{0}', space=sflag, size = 0x4, scoped, tag = 'scoped memory for tpu_custom_call.1']
    #allocation10 [shape = 'u8[65536]{0}', space=vmem, size = 0x10000, scoped, tag = 'input window, operand 6, single buffered']
    #allocation11 [shape = 'u8[262144]{0}', space=vmem, size = 0x40000, scoped, tag = 'output window, operand 0, single buffered']
    %12 = vsyncpa [#allocation3], 0
    %13 = vsyncpa [#allocation6], 0
    %14 = vsyncpa [#allocation9], 0
    %15 = vsyncpa [#allocation4], 0
    // Predicated region
    $region2: #{tpu_custom_call.1} parent=1 // pred_check
      _
    $region3: #{tpu_custom_call.1} parent=1 // pred_check_branch
      %17 = sbr.rel (0) target = $region5
    $region4: #{tpu_custom_call.1} parent=1 // pred_region
      %s19 = ssub.s32 4096, 4096
      %20 = vsyncadd [#allocation3], %s19
      %s21 = sshll.u32 [#allocation2], 4
      %s22 = int_to_ptr.vmem [resolvable:$true] %s21
      %27 = dma.hbm_to_vmem [thread:$0]  %s0, 4096, %s22, [#allocation3], 64, 64, 4
    $region5: #{tpu_custom_call.1} parent=1 // pred_fallthru
      _
    // Predicated region
    $region6: #{tpu_custom_call.1} parent=1 // pred_check
      _
    $region7: #{tpu_custom_call.1} parent=1 // pred_check_branch
      %29 = sbr.rel (0) target = $region9
    $region8: #{tpu_custom_call.1} parent=1 // pred_region
      %s31 = ssub.s32 1024, 1024
      %32 = vsyncadd [#allocation6], %s31
      %s33 = sshll.u32 [#allocation5], 4
      %s34 = int_to_ptr.vmem [resolvable:$true] %s33
      %39 = dma.hbm_to_vmem [thread:$0]  %s1, 1024, %s34, [#allocation6], 64, 64, 4
    $region9: #{tpu_custom_call.1} parent=1 // pred_fallthru
      _
    // Predicated region
    $region10: #{tpu_custom_call.1} parent=1 // pred_check
      _
    $region11: #{tpu_custom_call.1} parent=1 // pred_check_branch
      %41 = sbr.rel (0) target = $region13
    $region12: #{tpu_custom_call.1} parent=1 // pred_region
      _
    $region13: #{tpu_custom_call.1} parent=1 // pred_fallthru
      _
    // Predicated region
    $region14: #{tpu_custom_call.1} parent=1 // pred_check
      _
    $region15: #{tpu_custom_call.1} parent=1 // pred_check_branch
      %43 = sbr.rel (0) target = $region17
    $region16: #{tpu_custom_call.1} parent=1 // pred_region
      %s45 = ssub.s32 1024, 1024
      %46 = vsyncadd [#allocation6], %s45
      %s47 = sshll.u32 [#allocation7], 4
      %s48 = int_to_ptr.vmem [resolvable:$true] %s47
      %53 = dma.hbm_to_vmem [thread:$0]  %s3, 1024, %s48, [#allocation6], 64, 64, 4
    $region17: #{tpu_custom_call.1} parent=1 // pred_fallthru
      _
    // Predicated region
    $region18: #{tpu_custom_call.1} parent=1 // pred_check
      _
    $region19: #{tpu_custom_call.1} parent=1 // pred_check_branch
      %55 = sbr.rel (0) target = $region21
    $region20: #{tpu_custom_call.1} parent=1 // pred_region
      %s57 = ssub.s32 16, 16
      %58 = vsyncadd [#allocation9], %s57
      %s60 = sshll.u32 [#allocation8], 4
      %s61 = int_to_ptr.vmem [resolvable:$true] %s60
      %63 = dma.hbm_to_vmem [thread:$0]  %s4, 16, %s61, [#allocation9]
    $region21: #{tpu_custom_call.1} parent=1 // pred_fallthru
      _
    // Predicated region
    $region22: #{tpu_custom_call.1} parent=1 // pred_check
      _
    $region23: #{tpu_custom_call.1} parent=1 // pred_check_branch
      %65 = sbr.rel (0) target = $region25
    $region24: #{tpu_custom_call.1} parent=1 // pred_region
      _
    $region25: #{tpu_custom_call.1} parent=1 // pred_fallthru
      _
    // Predicated region
    $region26: #{tpu_custom_call.1} parent=1 // pred_check
      _
    $region27: #{tpu_custom_call.1} parent=1 // pred_check_branch
      %67 = sbr.rel (0) target = $region29
    $region28: #{tpu_custom_call.1} parent=1 // pred_region
      %s69 = ssub.s32 2048, 2048
      %70 = vsyncadd [#allocation9], %s69
      %s71 = sshll.u32 [#allocation10], 4
      %s72 = int_to_ptr.vmem [resolvable:$true] %s71
      %77 = dma.hbm_to_vmem [thread:$0]  %s6, 2048, %s72, [#allocation9], 128, 128, 8
    $region29: #{tpu_custom_call.1} parent=1 // pred_fallthru
      _
    // Predicated region
    $region30: #{tpu_custom_call.1} parent=1 // pred_check
      _
    $region31: #{tpu_custom_call.1} parent=1 // pred_check_branch
      %79 = sbr.rel (0) target = $region33
    $region32: #{tpu_custom_call.1} parent=1 // pred_region
      %80 = dma.done [#allocation3], 4096
    $region33: #{tpu_custom_call.1} parent=1 // pred_fallthru
      _
    // Predicated region
    $region34: #{tpu_custom_call.1} parent=1 // pred_check
      _
    $region35: #{tpu_custom_call.1} parent=1 // pred_check_branch
      %82 = sbr.rel (0) target = $region37
    $region36: #{tpu_custom_call.1} parent=1 // pred_region
      %83 = dma.done [#allocation6], 1024
    $region37: #{tpu_custom_call.1} parent=1 // pred_fallthru
      _
    // Predicated region
    $region38: #{tpu_custom_call.1} parent=1 // pred_check
      _
    $region39: #{tpu_custom_call.1} parent=1 // pred_check_branch
      %85 = sbr.rel (0) target = $region41
    $region40: #{tpu_custom_call.1} parent=1 // pred_region
      %86 = dma.done [#allocation6], 1024
    $region41: #{tpu_custom_call.1} parent=1 // pred_fallthru
      _
    // Predicated region
    $region42: #{tpu_custom_call.1} parent=1 // pred_check
      _
    $region43: #{tpu_custom_call.1} parent=1 // pred_check_branch
      %88 = sbr.rel (0) target = $region45
    $region44: #{tpu_custom_call.1} parent=1 // pred_region
      %89 = dma.done [#allocation9], 16
    $region45: #{tpu_custom_call.1} parent=1 // pred_fallthru
      _
    // Predicated region
    $region46: #{tpu_custom_call.1} parent=1 // pred_check
      _
    $region47: #{tpu_custom_call.1} parent=1 // pred_check_branch
      %91 = sbr.rel (0) target = $region49
    $region48: #{tpu_custom_call.1} parent=1 // pred_region
      %92 = dma.done [#allocation9], 2048
    $region49: #{tpu_custom_call.1} parent=1 // pred_fallthru
      _
    %v94 = vld [vmem:[#allocation2] sm:$0xf]
    %v95 = vld [vmem:[#allocation2 + $0x4] sm:$0xf]
    %v96 = vld [vmem:[#allocation2 + $0x8] sm:$0xf]
    %v97 = vld [vmem:[#allocation2 + $0xc] sm:$0xf]
    %v98 = vld [vmem:[#allocation2 + $0x10] sm:$0xf]
    %v99 = vld [vmem:[#allocation2 + $0x14] sm:$0xf]
    %v100 = vld [vmem:[#allocation2 + $0x18] sm:$0xf]
    %v101 = vld [vmem:[#allocation2 + $0x1c] sm:$0xf]
    %v102 = vld [vmem:[#allocation2 + $0x20] sm:$0xf]
    %v103 = vld [vmem:[#allocation2 + $0x24] sm:$0xf]
    %v104 = vld [vmem:[#allocation2 + $0x28] sm:$0xf]
    %v105 = vld [vmem:[#allocation2 + $0x2c] sm:$0xf]
    %v106 = vld [vmem:[#allocation2 + $0x30] sm:$0xf]
    %v107 = vld [vmem:[#allocation2 + $0x34] sm:$0xf]
    %v108 = vld [vmem:[#allocation2 + $0x38] sm:$0xf]
    %v109 = vld [vmem:[#allocation2 + $0x3c] sm:$0xf]
    %v110 = vld [vmem:[#allocation2 + $0x40] sm:$0xf]
    %v111 = vld [vmem:[#allocation2 + $0x44] sm:$0xf]
    %v112 = vld [vmem:[#allocation2 + $0x48] sm:$0xf]
    %v113 = vld [vmem:[#allocation2 + $0x4c] sm:$0xf]
    %v114 = vld [vmem:[#allocation2 + $0x50] sm:$0xf]
    %v115 = vld [vmem:[#allocation2 + $0x54] sm:$0xf]
    %v116 = vld [vmem:[#allocation2 + $0x58] sm:$0xf]
    %v117 = vld [vmem:[#allocation2 + $0x5c] sm:$0xf]
    %v118 = vld [vmem:[#allocation2 + $0x60] sm:$0xf]
    %v119 = vld [vmem:[#allocation2 + $0x64] sm:$0xf]
    %v120 = vld [vmem:[#allocation2 + $0x68] sm:$0xf]
    %v121 = vld [vmem:[#allocation2 + $0x6c] sm:$0xf]
    %v122 = vld [vmem:[#allocation2 + $0x70] sm:$0xf]
    %v123 = vld [vmem:[#allocation2 + $0x74] sm:$0xf]
    %v124 = vld [vmem:[#allocation2 + $0x78] sm:$0xf]
    %v125 = vld [vmem:[#allocation2 + $0x7c] sm:$0xf]
    %v126 = vld [vmem:[#allocation2 + $0x80] sm:$0xf]
    %v127 = vld [vmem:[#allocation2 + $0x84] sm:$0xf]
    %v128 = vld [vmem:[#allocation2 + $0x88] sm:$0xf]
    %v129 = vld [vmem:[#allocation2 + $0x8c] sm:$0xf]
    %v130 = vld [vmem:[#allocation2 + $0x90] sm:$0xf]
    %v131 = vld [vmem:[#allocation2 + $0x94] sm:$0xf]
    %v132 = vld [vmem:[#allocation2 + $0x98] sm:$0xf]
    %v133 = vld [vmem:[#allocation2 + $0x9c] sm:$0xf]
    %v134 = vld [vmem:[#allocation2 + $0xa0] sm:$0xf]
    %v135 = vld [vmem:[#allocation2 + $0xa4] sm:$0xf]
    %v136 = vld [vmem:[#allocation2 + $0xa8] sm:$0xf]
    %v137 = vld [vmem:[#allocation2 + $0xac] sm:$0xf]
    %v138 = vld [vmem:[#allocation2 + $0xb0] sm:$0xf]
    %v139 = vld [vmem:[#allocation2 + $0xb4] sm:$0xf]
    %v140 = vld [vmem:[#allocation2 + $0xb8] sm:$0xf]
    %v141 = vld [vmem:[#allocation2 + $0xbc] sm:$0xf]
    %v142 = vld [vmem:[#allocation2 + $0xc0] sm:$0xf]
    %v143 = vld [vmem:[#allocation2 + $0xc4] sm:$0xf]
    %v144 = vld [vmem:[#allocation2 + $0xc8] sm:$0xf]
    %v145 = vld [vmem:[#allocation2 + $0xcc] sm:$0xf]
    %v146 = vld [vmem:[#allocation2 + $0xd0] sm:$0xf]
    %v147 = vld [vmem:[#allocation2 + $0xd4] sm:$0xf]
    %v148 = vld [vmem:[#allocation2 + $0xd8] sm:$0xf]
    %v149 = vld [vmem:[#allocation2 + $0xdc] sm:$0xf]
    %v150 = vld [vmem:[#allocation2 + $0xe0] sm:$0xf]
    %v151 = vld [vmem:[#allocation2 + $0xe4] sm:$0xf]
    %v152 = vld [vmem:[#allocation2 + $0xe8] sm:$0xf]
    %v153 = vld [vmem:[#allocation2 + $0xec] sm:$0xf]
    %v154 = vld [vmem:[#allocation2 + $0xf0] sm:$0xf]
    %v155 = vld [vmem:[#allocation2 + $0xf4] sm:$0xf]
    %v156 = vld [vmem:[#allocation2 + $0xf8] sm:$0xf]
    %v157 = vld [vmem:[#allocation2 + $0xfc] sm:$0xf]
    %v158 = vld [vmem:[#allocation5] sm:$0xf]
    %v159 = vld [vmem:[#allocation5 + $0x4] sm:$0xf]
    %v160 = vld [vmem:[#allocation5 + $0x8] sm:$0xf]
    %v161 = vld [vmem:[#allocation5 + $0xc] sm:$0xf]
    %v162 = vld [vmem:[#allocation5 + $0x10] sm:$0xf]
    %v163 = vld [vmem:[#allocation5 + $0x14] sm:$0xf]
    %v164 = vld [vmem:[#allocation5 + $0x18] sm:$0xf]
    %v165 = vld [vmem:[#allocation5 + $0x1c] sm:$0xf]
    %v166 = vld [vmem:[#allocation5 + $0x20] sm:$0xf]
    %v167 = vld [vmem:[#allocation5 + $0x24] sm:$0xf]
    %v168 = vld [vmem:[#allocation5 + $0x28] sm:$0xf]
    %v169 = vld [vmem:[#allocation5 + $0x2c] sm:$0xf]
    %v170 = vld [vmem:[#allocation5 + $0x30] sm:$0xf]
    %v171 = vld [vmem:[#allocation5 + $0x34] sm:$0xf]
    %v172 = vld [vmem:[#allocation5 + $0x38] sm:$0xf]
    %v173 = vld [vmem:[#allocation5 + $0x3c] sm:$0xf]
    %v174 = vld [vmem:[%s2] sm:$0x1]
    %v176 = vlaneseq
    %v177 = vshrl.u32 %v176, 7
    %v178 = vsub.s32 0, %v177
    %v179 = vrot.slane %v174, %v178
    %v245 = vunpack.c.l.b16 %v94
    %v246 = vunpack.c.l.b16 %v95
    %v247 = vunpack.c.l.b16 %v96
    %v248 = vunpack.c.l.b16 %v97
    %v249 = vunpack.c.l.b16 %v98
    %v250 = vunpack.c.l.b16 %v99
    %v251 = vunpack.c.l.b16 %v100
    %v252 = vunpack.c.l.b16 %v101
    %v253 = vunpack.c.l.b16 %v102
    %v254 = vunpack.c.l.b16 %v103
    %v255 = vunpack.c.l.b16 %v104
    %v256 = vunpack.c.l.b16 %v105
    %v257 = vunpack.c.l.b16 %v106
    %v258 = vunpack.c.l.b16 %v107
    %v259 = vunpack.c.l.b16 %v108
    %v260 = vunpack.c.l.b16 %v109
    %v261 = vunpack.c.l.b16 %v110
    %v262 = vunpack.c.l.b16 %v111
    %v263 = vunpack.c.l.b16 %v112
    %v264 = vunpack.c.l.b16 %v113
    %v265 = vunpack.c.l.b16 %v114
    %v266 = vunpack.c.l.b16 %v115
    %v267 = vunpack.c.l.b16 %v116
    %v268 = vunpack.c.l.b16 %v117
    %v269 = vunpack.c.l.b16 %v118
    %v270 = vunpack.c.l.b16 %v119
    %v271 = vunpack.c.l.b16 %v120
    %v272 = vunpack.c.l.b16 %v121
    %v273 = vunpack.c.l.b16 %v122
    %v274 = vunpack.c.l.b16 %v123
    %v275 = vunpack.c.l.b16 %v124
    %v276 = vunpack.c.l.b16 %v125
    %v277 = vunpack.c.l.b16 %v126
    %v278 = vunpack.c.l.b16 %v127
    %v279 = vunpack.c.l.b16 %v128
    %v280 = vunpack.c.l.b16 %v129
    %v281 = vunpack.c.l.b16 %v130
    %v282 = vunpack.c.l.b16 %v131
    %v283 = vunpack.c.l.b16 %v132
    %v284 = vunpack.c.l.b16 %v133
    %v285 = vunpack.c.l.b16 %v134
    %v286 = vunpack.c.l.b16 %v135
    %v287 = vunpack.c.l.b16 %v136
    %v288 = vunpack.c.l.b16 %v137
    %v289 = vunpack.c.l.b16 %v138
    %v290 = vunpack.c.l.b16 %v139
    %v291 = vunpack.c.l.b16 %v140
    %v292 = vunpack.c.l.b16 %v141
    %v293 = vunpack.c.l.b16 %v142
    %v294 = vunpack.c.l.b16 %v143
    %v295 = vunpack.c.l.b16 %v144
    %v296 = vunpack.c.l.b16 %v145
    %v297 = vunpack.c.l.b16 %v146
    %v298 = vunpack.c.l.b16 %v147
    %v299 = vunpack.c.l.b16 %v148
    %v300 = vunpack.c.l.b16 %v149
    %v301 = vunpack.c.l.b16 %v150
    %v302 = vunpack.c.l.b16 %v151
    %v303 = vunpack.c.l.b16 %v152
    %v304 = vunpack.c.l.b16 %v153
    %v305 = vunpack.c.l.b16 %v154
    %v306 = vunpack.c.l.b16 %v155
    %v307 = vunpack.c.l.b16 %v156
    %v308 = vunpack.c.l.b16 %v157
    %v309 = vpack.c.b16 %v246, %v245
    %v310 = vpack.c.b16 %v248, %v247
    %v311 = vpack.c.b16 %v250, %v249
    %v312 = vpack.c.b16 %v252, %v251
    %v313 = vpack.c.b16 %v254, %v253
    %v314 = vpack.c.b16 %v256, %v255
    %v315 = vpack.c.b16 %v258, %v257
    %v316 = vpack.c.b16 %v260, %v259
    %v317 = vpack.c.b16 %v262, %v261
    %v318 = vpack.c.b16 %v264, %v263
    %v319 = vpack.c.b16 %v266, %v265
    %v320 = vpack.c.b16 %v268, %v267
    %v321 = vpack.c.b16 %v270, %v269
    %v322 = vpack.c.b16 %v272, %v271
    %v323 = vpack.c.b16 %v274, %v273
    %v324 = vpack.c.b16 %v276, %v275
    %v325 = vpack.c.b16 %v278, %v277
    %v326 = vpack.c.b16 %v280, %v279
    %v327 = vpack.c.b16 %v282, %v281
    %v328 = vpack.c.b16 %v284, %v283
    %v329 = vpack.c.b16 %v286, %v285
    %v330 = vpack.c.b16 %v288, %v287
    %v331 = vpack.c.b16 %v290, %v289
    %v332 = vpack.c.b16 %v292, %v291
    %v333 = vpack.c.b16 %v294, %v293
    %v334 = vpack.c.b16 %v296, %v295
    %v335 = vpack.c.b16 %v298, %v297
    %v336 = vpack.c.b16 %v300, %v299
    %v337 = vpack.c.b16 %v302, %v301
    %v338 = vpack.c.b16 %v304, %v303
    %v339 = vpack.c.b16 %v306, %v305
    %v340 = vpack.c.b16 %v308, %v307
    %v389 = vunpack.c.l.b16 %v158
    %v390 = vunpack.c.l.b16 %v159
    %v391 = vunpack.c.l.b16 %v160
    %v392 = vunpack.c.l.b16 %v161
    %v393 = vunpack.c.l.b16 %v162
    %v394 = vunpack.c.l.b16 %v163
    %v395 = vunpack.c.l.b16 %v164
    %v396 = vunpack.c.l.b16 %v165
    %v397 = vunpack.c.l.b16 %v166
    %v398 = vunpack.c.l.b16 %v167
    %v399 = vunpack.c.l.b16 %v168
    %v400 = vunpack.c.l.b16 %v169
    %v401 = vunpack.c.l.b16 %v170
    %v402 = vunpack.c.l.b16 %v171
    %v403 = vunpack.c.l.b16 %v172
    %v404 = vunpack.c.l.b16 %v173
    %v405 = vpack.c.b16 %v390, %v389
    %v406 = vpack.c.b16 %v392, %v391
    %v407 = vpack.c.b16 %v394, %v393
    %v408 = vpack.c.b16 %v396, %v395
    %v409 = vpack.c.b16 %v398, %v397
    %v410 = vpack.c.b16 %v400, %v399
    %v411 = vpack.c.b16 %v402, %v401
    %v412 = vpack.c.b16 %v404, %v403
    %421 = vmatprep.subr.bf16.mxu0 0
    %422 = vmatpush1.bf16.msra.mxu0 %v412
    %423 = vmatprep.subr.bf16.mxu0 0
    %424 = vmatpush1.bf16.msra.mxu0 %v411
    %425 = vmatprep.subr.bf16.mxu0 0
    %426 = vmatpush1.bf16.msra.mxu0 %v410
    %427 = vmatprep.subr.bf16.mxu0 0
    %428 = vmatpush1.bf16.msra.mxu0 %v409
    %429 = vmatprep.subr.bf16.mxu0 0
    %430 = vmatpush1.bf16.msra.mxu0 %v408
    %431 = vmatprep.subr.bf16.mxu0 0
    %432 = vmatpush1.bf16.msra.mxu0 %v407
    %433 = vmatprep.subr.bf16.mxu0 0
    %434 = vmatpush1.bf16.msra.mxu0 %v406
    %435 = vmatprep.subr.bf16.mxu0 0
    %436 = vmatpush1.bf16.msra.mxu0 %v405
    %437 = vmatprep.subr.bf16.mxu0 0
    %438 = vmatpush2.bf16.msra.mxu0 0
    %439 = vmatprep.subr.bf16.mxu0 0
    %440 = vmatpush2.bf16.msra.mxu0 0
    %441 = vmatprep.subr.bf16.mxu0 0
    %442 = vmatpush2.bf16.msra.mxu0 0
    %443 = vmatprep.subr.bf16.mxu0 0
    %444 = vmatpush2.bf16.msra.mxu0 0
    %445 = vmatprep.subr.bf16.mxu0 0
    %446 = vmatpush2.bf16.msra.mxu0 0
    %447 = vmatprep.subr.bf16.mxu0 0
    %448 = vmatpush2.bf16.msra.mxu0 0
    %449 = vmatprep.subr.bf16.mxu0 0
    %450 = vmatpush2.bf16.msra.mxu0 0
    %451 = vmatprep.subr.bf16.mxu0 0
    %452 = vmatpush2.bf16.msra.mxu0 0
    %453 = vmatprep.mubr.bf16.mxu0 0
    %454 = vmatmul.mubr.bf16.gmra.mxu0 %v309
    %v455 = vpop.f32.mrf.mxu0
    %v456 = vadd.f32 %v179, %v455
    %v457 = vpop.f32.mrf.mxu0
    %v458 = vpop.f32.mrf.mxu0
    %v459 = vadd.f32 %v179, %v458
    %v460 = vpop.f32.mrf.mxu0
    %461 = vmatprep.mubr.bf16.mxu0 0
    %462 = vmatmul.mubr.bf16.gmra.mxu0 %v310
    %v463 = vpop.f32.mrf.mxu0
    %v464 = vadd.f32 %v179, %v463
    %v465 = vpop.f32.mrf.mxu0
    %v466 = vpop.f32.mrf.mxu0
    %v467 = vadd.f32 %v179, %v466
    %v468 = vpop.f32.mrf.mxu0
    %469 = vmatprep.mubr.bf16.mxu0 0
    %470 = vmatmul.mubr.bf16.gmra.mxu0 %v311
    %v471 = vpop.f32.mrf.mxu0
    %v472 = vadd.f32 %v179, %v471
    %v473 = vpop.f32.mrf.mxu0
    %v474 = vpop.f32.mrf.mxu0
    %v475 = vadd.f32 %v179, %v474
    %v476 = vpop.f32.mrf.mxu0
    %477 = vmatprep.mubr.bf16.mxu0 0
    %478 = vmatmul.mubr.bf16.gmra.mxu0 %v312
    %v479 = vpop.f32.mrf.mxu0
    %v480 = vadd.f32 %v179, %v479
    %v481 = vpop.f32.mrf.mxu0
    %v482 = vpop.f32.mrf.mxu0
    %v483 = vadd.f32 %v179, %v482
    %v484 = vpop.f32.mrf.mxu0
    %485 = vmatprep.mubr.bf16.mxu0 0
    %486 = vmatmul.mubr.bf16.gmra.mxu0 %v313
    %v487 = vpop.f32.mrf.mxu0
    %v488 = vadd.f32 %v179, %v487
    %v489 = vpop.f32.mrf.mxu0
    %v490 = vpop.f32.mrf.mxu0
    %v491 = vadd.f32 %v179, %v490
    %v492 = vpop.f32.mrf.mxu0
    %493 = vmatprep.mubr.bf16.mxu0 0
    %494 = vmatmul.mubr.bf16.gmra.mxu0 %v314
    %v495 = vpop.f32.mrf.mxu0
    %v496 = vadd.f32 %v179, %v495
    %v497 = vpop.f32.mrf.mxu0
    %v498 = vpop.f32.mrf.mxu0
    %v499 = vadd.f32 %v179, %v498
    %v500 = vpop.f32.mrf.mxu0
    %501 = vmatprep.mubr.bf16.mxu0 0
    %502 = vmatmul.mubr.bf16.gmra.mxu0 %v315
    %v503 = vpop.f32.mrf.mxu0
    %v504 = vadd.f32 %v179, %v503
    %v505 = vpop.f32.mrf.mxu0
    %v506 = vpop.f32.mrf.mxu0
    %v507 = vadd.f32 %v179, %v506
    %v508 = vpop.f32.mrf.mxu0
    %509 = vmatprep.mubr.bf16.mxu0 0
    %510 = vmatmul.mubr.bf16.gmra.mxu0 %v316
    %v511 = vpop.f32.mrf.mxu0
    %v512 = vadd.f32 %v179, %v511
    %v513 = vpop.f32.mrf.mxu0
    %v514 = vpop.f32.mrf.mxu0
    %v515 = vadd.f32 %v179, %v514
    %v516 = vpop.f32.mrf.mxu0
    %517 = vmatprep.mubr.bf16.mxu0 0
    %518 = vmatmul.mubr.bf16.gmra.mxu0 %v317
    %v519 = vpop.f32.mrf.mxu0
    %v520 = vadd.f32 %v179, %v519
    %v521 = vpop.f32.mrf.mxu0
    %v522 = vpop.f32.mrf.mxu0
    %v523 = vadd.f32 %v179, %v522
    %v524 = vpop.f32.mrf.mxu0
    %525 = vmatprep.mubr.bf16.mxu0 0
    %526 = vmatmul.mubr.bf16.gmra.mxu0 %v318
    %v527 = vpop.f32.mrf.mxu0
    %v528 = vadd.f32 %v179, %v527
    %v529 = vpop.f32.mrf.mxu0
    %v530 = vpop.f32.mrf.mxu0
    %v531 = vadd.f32 %v179, %v530
    %v532 = vpop.f32.mrf.mxu0
    %533 = vmatprep.mubr.bf16.mxu0 0
    %534 = vmatmul.mubr.bf16.gmra.mxu0 %v319
    %v535 = vpop.f32.mrf.mxu0
    %v536 = vadd.f32 %v179, %v535
    %v537 = vpop.f32.mrf.mxu0
    %v538 = vpop.f32.mrf.mxu0
    %v539 = vadd.f32 %v179, %v538
    %v540 = vpop.f32.mrf.mxu0
    %541 = vmatprep.mubr.bf16.mxu0 0
    %542 = vmatmul.mubr.bf16.gmra.mxu0 %v320
    %v543 = vpop.f32.mrf.mxu0
    %v544 = vadd.f32 %v179, %v543
    %v545 = vpop.f32.mrf.mxu0
    %v546 = vpop.f32.mrf.mxu0
    %v547 = vadd.f32 %v179, %v546
    %v548 = vpop.f32.mrf.mxu0
    %549 = vmatprep.mubr.bf16.mxu0 0
    %550 = vmatmul.mubr.bf16.gmra.mxu0 %v321
    %v551 = vpop.f32.mrf.mxu0
    %v552 = vadd.f32 %v179, %v551
    %v553 = vpop.f32.mrf.mxu0
    %v554 = vpop.f32.mrf.mxu0
    %v555 = vadd.f32 %v179, %v554
    %v556 = vpop.f32.mrf.mxu0
    %557 = vmatprep.mubr.bf16.mxu0 0
    %558 = vmatmul.mubr.bf16.gmra.mxu0 %v322
    %v559 = vpop.f32.mrf.mxu0
    %v560 = vadd.f32 %v179, %v559
    %v561 = vpop.f32.mrf.mxu0
    %v562 = vpop.f32.mrf.mxu0
    %v563 = vadd.f32 %v179, %v562
    %v564 = vpop.f32.mrf.mxu0
    %565 = vmatprep.mubr.bf16.mxu0 0
    %566 = vmatmul.mubr.bf16.gmra.mxu0 %v323
    %v567 = vpop.f32.mrf.mxu0
    %v568 = vadd.f32 %v179, %v567
    %v569 = vpop.f32.mrf.mxu0
    %v570 = vpop.f32.mrf.mxu0
    %v571 = vadd.f32 %v179, %v570
    %v572 = vpop.f32.mrf.mxu0
    %573 = vmatprep.mubr.bf16.mxu0 0
    %574 = vmatmul.mubr.bf16.gmra.mxu0 %v324
    %v575 = vpop.f32.mrf.mxu0
    %v576 = vadd.f32 %v179, %v575
    %v577 = vpop.f32.mrf.mxu0
    %v578 = vpop.f32.mrf.mxu0
    %v579 = vadd.f32 %v179, %v578
    %v580 = vpop.f32.mrf.mxu0
    %581 = vmatprep.mubr.bf16.mxu0 0
    %582 = vmatmul.mubr.bf16.gmra.mxu0 %v325
    %v583 = vpop.f32.mrf.mxu0
    %v584 = vadd.f32 %v179, %v583
    %v585 = vpop.f32.mrf.mxu0
    %v586 = vpop.f32.mrf.mxu0
    %v587 = vadd.f32 %v179, %v586
    %v588 = vpop.f32.mrf.mxu0
    %589 = vmatprep.mubr.bf16.mxu0 0
    %590 = vmatmul.mubr.bf16.gmra.mxu0 %v326
    %v591 = vpop.f32.mrf.mxu0
    %v592 = vadd.f32 %v179, %v591
    %v593 = vpop.f32.mrf.mxu0
    %v594 = vpop.f32.mrf.mxu0
    %v595 = vadd.f32 %v179, %v594
    %v596 = vpop.f32.mrf.mxu0
    %597 = vmatprep.mubr.bf16.mxu0 0
    %598 = vmatmul.mubr.bf16.gmra.mxu0 %v327
    %v599 = vpop.f32.mrf.mxu0
    %v600 = vadd.f32 %v179, %v599
    %v601 = vpop.f32.mrf.mxu0
    %v602 = vpop.f32.mrf.mxu0
    %v603 = vadd.f32 %v179, %v602
    %v604 = vpop.f32.mrf.mxu0
    %605 = vmatprep.mubr.bf16.mxu0 0
    %606 = vmatmul.mubr.bf16.gmra.mxu0 %v328
    %v607 = vpop.f32.mrf.mxu0
    %v608 = vadd.f32 %v179, %v607
    %v609 = vpop.f32.mrf.mxu0
    %v610 = vpop.f32.mrf.mxu0
    %v611 = vadd.f32 %v179, %v610
    %v612 = vpop.f32.mrf.mxu0
    %613 = vmatprep.mubr.bf16.mxu0 0
    %614 = vmatmul.mubr.bf16.gmra.mxu0 %v329
    %v615 = vpop.f32.mrf.mxu0
    %v616 = vadd.f32 %v179, %v615
    %v617 = vpop.f32.mrf.mxu0
    %v618 = vpop.f32.mrf.mxu0
    %v619 = vadd.f32 %v179, %v618
    %v620 = vpop.f32.mrf.mxu0
    %621 = vmatprep.mubr.bf16.mxu0 0
    %622 = vmatmul.mubr.bf16.gmra.mxu0 %v330
    %v623 = vpop.f32.mrf.mxu0
    %v624 = vadd.f32 %v179, %v623
    %v625 = vpop.f32.mrf.mxu0
    %v626 = vpop.f32.mrf.mxu0
    %v627 = vadd.f32 %v179, %v626
    %v628 = vpop.f32.mrf.mxu0
    %629 = vmatprep.mubr.bf16.mxu0 0
    %630 = vmatmul.mubr.bf16.gmra.mxu0 %v331
    %v631 = vpop.f32.mrf.mxu0
    %v632 = vadd.f32 %v179, %v631
    %v633 = vpop.f32.mrf.mxu0
    %v634 = vpop.f32.mrf.mxu0
    %v635 = vadd.f32 %v179, %v634
    %v636 = vpop.f32.mrf.mxu0
    %637 = vmatprep.mubr.bf16.mxu0 0
    %638 = vmatmul.mubr.bf16.gmra.mxu0 %v332
    %v639 = vpop.f32.mrf.mxu0
    %v640 = vadd.f32 %v179, %v639
    %v641 = vpop.f32.mrf.mxu0
    %v642 = vpop.f32.mrf.mxu0
    %v643 = vadd.f32 %v179, %v642
    %v644 = vpop.f32.mrf.mxu0
    %645 = vmatprep.mubr.bf16.mxu0 0
    %646 = vmatmul.mubr.bf16.gmra.mxu0 %v333
    %v647 = vpop.f32.mrf.mxu0
    %v648 = vadd.f32 %v179, %v647
    %v649 = vpop.f32.mrf.mxu0
    %v650 = vpop.f32.mrf.mxu0
    %v651 = vadd.f32 %v179, %v650
    %v652 = vpop.f32.mrf.mxu0
    %653 = vmatprep.mubr.bf16.mxu0 0
    %654 = vmatmul.mubr.bf16.gmra.mxu0 %v334
    %v655 = vpop.f32.mrf.mxu0
    %v656 = vadd.f32 %v179, %v655
    %v657 = vpop.f32.mrf.mxu0
    %v658 = vpop.f32.mrf.mxu0
    %v659 = vadd.f32 %v179, %v658
    %v660 = vpop.f32.mrf.mxu0
    %661 = vmatprep.mubr.bf16.mxu0 0
    %662 = vmatmul.mubr.bf16.gmra.mxu0 %v335
    %v663 = vpop.f32.mrf.mxu0
    %v664 = vadd.f32 %v179, %v663
    %v665 = vpop.f32.mrf.mxu0
    %v666 = vpop.f32.mrf.mxu0
    %v667 = vadd.f32 %v179, %v666
    %v668 = vpop.f32.mrf.mxu0
    %669 = vmatprep.mubr.bf16.mxu0 0
    %670 = vmatmul.mubr.bf16.gmra.mxu0 %v336
    %v671 = vpop.f32.mrf.mxu0
    %v672 = vadd.f32 %v179, %v671
    %v673 = vpop.f32.mrf.mxu0
    %v674 = vpop.f32.mrf.mxu0
    %v675 = vadd.f32 %v179, %v674
    %v676 = vpop.f32.mrf.mxu0
    %677 = vmatprep.mubr.bf16.mxu0 0
    %678 = vmatmul.mubr.bf16.gmra.mxu0 %v337
    %v679 = vpop.f32.mrf.mxu0
    %v680 = vadd.f32 %v179, %v679
    %v681 = vpop.f32.mrf.mxu0
    %v682 = vpop.f32.mrf.mxu0
    %v683 = vadd.f32 %v179, %v682
    %v684 = vpop.f32.mrf.mxu0
    %685 = vmatprep.mubr.bf16.mxu0 0
    %686 = vmatmul.mubr.bf16.gmra.mxu0 %v338
    %v687 = vpop.f32.mrf.mxu0
    %v688 = vadd.f32 %v179, %v687
    %v689 = vpop.f32.mrf.mxu0
    %v690 = vpop.f32.mrf.mxu0
    %v691 = vadd.f32 %v179, %v690
    %v692 = vpop.f32.mrf.mxu0
    %693 = vmatprep.mubr.bf16.mxu0 0
    %694 = vmatmul.mubr.bf16.gmra.mxu0 %v339
    %v695 = vpop.f32.mrf.mxu0
    %v696 = vadd.f32 %v179, %v695
    %v697 = vpop.f32.mrf.mxu0
    %v698 = vpop.f32.mrf.mxu0
    %v699 = vadd.f32 %v179, %v698
    %v700 = vpop.f32.mrf.mxu0
    %701 = vmatprep.mubr.bf16.mxu0 0
    %702 = vmatmul.mubr.bf16.gmra.mxu0 %v340
    %v703 = vpop.f32.mrf.mxu0
    %v704 = vadd.f32 %v179, %v703
    %v705 = vpop.f32.mrf.mxu0
    %v706 = vpop.f32.mrf.mxu0
    %v707 = vadd.f32 %v179, %v706
    %v708 = vpop.f32.mrf.mxu0
    %709 = vdwg.mxu0
    %vm710 = vcmp.gt.f32.partialorder %v456, 0.0
    %vm711 = vcmp.gt.f32.partialorder %v459, 0.0
    %vm712 = vcmp.gt.f32.partialorder %v464, 0.0
    %vm713 = vcmp.gt.f32.partialorder %v467, 0.0
    %vm714 = vcmp.gt.f32.partialorder %v472, 0.0
    %vm715 = vcmp.gt.f32.partialorder %v475, 0.0
    %vm716 = vcmp.gt.f32.partialorder %v480, 0.0
    %vm717 = vcmp.gt.f32.partialorder %v483, 0.0
    %vm718 = vcmp.gt.f32.partialorder %v488, 0.0
    %vm719 = vcmp.gt.f32.partialorder %v491, 0.0
    %vm720 = vcmp.gt.f32.partialorder %v496, 0.0
    %vm721 = vcmp.gt.f32.partialorder %v499, 0.0
    %vm722 = vcmp.gt.f32.partialorder %v504, 0.0
    %vm723 = vcmp.gt.f32.partialorder %v507, 0.0
    %vm724 = vcmp.gt.f32.partialorder %v512, 0.0
    %vm725 = vcmp.gt.f32.partialorder %v515, 0.0
    %vm726 = vcmp.gt.f32.partialorder %v520, 0.0
    %vm727 = vcmp.gt.f32.partialorder %v523, 0.0
    %vm728 = vcmp.gt.f32.partialorder %v528, 0.0
    %vm729 = vcmp.gt.f32.partialorder %v531, 0.0
    %vm730 = vcmp.gt.f32.partialorder %v536, 0.0
    %vm731 = vcmp.gt.f32.partialorder %v539, 0.0
    %vm732 = vcmp.gt.f32.partialorder %v544, 0.0
    %vm733 = vcmp.gt.f32.partialorder %v547, 0.0
    %vm734 = vcmp.gt.f32.partialorder %v552, 0.0
    %vm735 = vcmp.gt.f32.partialorder %v555, 0.0
    %vm736 = vcmp.gt.f32.partialorder %v560, 0.0
    %vm737 = vcmp.gt.f32.partialorder %v563, 0.0
    %vm738 = vcmp.gt.f32.partialorder %v568, 0.0
    %vm739 = vcmp.gt.f32.partialorder %v571, 0.0
    %vm740 = vcmp.gt.f32.partialorder %v576, 0.0
    %vm741 = vcmp.gt.f32.partialorder %v579, 0.0
    %vm742 = vcmp.gt.f32.partialorder %v584, 0.0
    %vm743 = vcmp.gt.f32.partialorder %v587, 0.0
    %vm744 = vcmp.gt.f32.partialorder %v592, 0.0
    %vm745 = vcmp.gt.f32.partialorder %v595, 0.0
    %vm746 = vcmp.gt.f32.partialorder %v600, 0.0
    %vm747 = vcmp.gt.f32.partialorder %v603, 0.0
    %vm748 = vcmp.gt.f32.partialorder %v608, 0.0
    %vm749 = vcmp.gt.f32.partialorder %v611, 0.0
    %vm750 = vcmp.gt.f32.partialorder %v616, 0.0
    %vm751 = vcmp.gt.f32.partialorder %v619, 0.0
    %vm752 = vcmp.gt.f32.partialorder %v624, 0.0
    %vm753 = vcmp.gt.f32.partialorder %v627, 0.0
    %vm754 = vcmp.gt.f32.partialorder %v632, 0.0
    %vm755 = vcmp.gt.f32.partialorder %v635, 0.0
    %vm756 = vcmp.gt.f32.partialorder %v640, 0.0
    %vm757 = vcmp.gt.f32.partialorder %v643, 0.0
    %vm758 = vcmp.gt.f32.partialorder %v648, 0.0
    %vm759 = vcmp.gt.f32.partialorder %v651, 0.0
    %vm760 = vcmp.gt.f32.partialorder %v656, 0.0
    %vm761 = vcmp.gt.f32.partialorder %v659, 0.0
    %vm762 = vcmp.gt.f32.partialorder %v664, 0.0
    %vm763 = vcmp.gt.f32.partialorder %v667, 0.0
    %vm764 = vcmp.gt.f32.partialorder %v672, 0.0
    %vm765 = vcmp.gt.f32.partialorder %v675, 0.0
    %vm766 = vcmp.gt.f32.partialorder %v680, 0.0
    %vm767 = vcmp.gt.f32.partialorder %v683, 0.0
    %vm768 = vcmp.gt.f32.partialorder %v688, 0.0
    %vm769 = vcmp.gt.f32.partialorder %v691, 0.0
    %vm770 = vcmp.gt.f32.partialorder %v696, 0.0
    %vm771 = vcmp.gt.f32.partialorder %v699, 0.0
    %vm772 = vcmp.gt.f32.partialorder %v704, 0.0
    %vm773 = vcmp.gt.f32.partialorder %v707, 0.0
    %v774 = vmul.f32 %v456, 0.1
    %v775 = vmul.f32 %v459, 0.1
    %v776 = vmul.f32 %v464, 0.1
    %v777 = vmul.f32 %v467, 0.1
    %v778 = vmul.f32 %v472, 0.1
    %v779 = vmul.f32 %v475, 0.1
    %v780 = vmul.f32 %v480, 0.1
    %v781 = vmul.f32 %v483, 0.1
    %v782 = vmul.f32 %v488, 0.1
    %v783 = vmul.f32 %v491, 0.1
    %v784 = vmul.f32 %v496, 0.1
    %v785 = vmul.f32 %v499, 0.1
    %v786 = vmul.f32 %v504, 0.1
    %v787 = vmul.f32 %v507, 0.1
    %v788 = vmul.f32 %v512, 0.1
    %v789 = vmul.f32 %v515, 0.1
    %v790 = vmul.f32 %v520, 0.1
    %v791 = vmul.f32 %v523, 0.1
    %v792 = vmul.f32 %v528, 0.1
    %v793 = vmul.f32 %v531, 0.1
    %v794 = vmul.f32 %v536, 0.1
    %v795 = vmul.f32 %v539, 0.1
    %v796 = vmul.f32 %v544, 0.1
    %v797 = vmul.f32 %v547, 0.1
    %v798 = vmul.f32 %v552, 0.1
    %v799 = vmul.f32 %v555, 0.1
    %v800 = vmul.f32 %v560, 0.1
    %v801 = vmul.f32 %v563, 0.1
    %v802 = vmul.f32 %v568, 0.1
    %v803 = vmul.f32 %v571, 0.1
    %v804 = vmul.f32 %v576, 0.1
    %v805 = vmul.f32 %v579, 0.1
    %v806 = vmul.f32 %v584, 0.1
    %v807 = vmul.f32 %v587, 0.1
    %v808 = vmul.f32 %v592, 0.1
    %v809 = vmul.f32 %v595, 0.1
    %v810 = vmul.f32 %v600, 0.1
    %v811 = vmul.f32 %v603, 0.1
    %v812 = vmul.f32 %v608, 0.1
    %v813 = vmul.f32 %v611, 0.1
    %v814 = vmul.f32 %v616, 0.1
    %v815 = vmul.f32 %v619, 0.1
    %v816 = vmul.f32 %v624, 0.1
    %v817 = vmul.f32 %v627, 0.1
    %v818 = vmul.f32 %v632, 0.1
    %v819 = vmul.f32 %v635, 0.1
    %v820 = vmul.f32 %v640, 0.1
    %v821 = vmul.f32 %v643, 0.1
    %v822 = vmul.f32 %v648, 0.1
    %v823 = vmul.f32 %v651, 0.1
    %v824 = vmul.f32 %v656, 0.1
    %v825 = vmul.f32 %v659, 0.1
    %v826 = vmul.f32 %v664, 0.1
    %v827 = vmul.f32 %v667, 0.1
    %v828 = vmul.f32 %v672, 0.1
    %v829 = vmul.f32 %v675, 0.1
    %v830 = vmul.f32 %v680, 0.1
    %v831 = vmul.f32 %v683, 0.1
    %v832 = vmul.f32 %v688, 0.1
    %v833 = vmul.f32 %v691, 0.1
    %v834 = vmul.f32 %v696, 0.1
    %v835 = vmul.f32 %v699, 0.1
    %v836 = vmul.f32 %v704, 0.1
    %v837 = vmul.f32 %v707, 0.1
    %v838 = vsel %vm710, %v456, %v774
    %v839 = vsel %vm711, %v459, %v775
    %v840 = vsel %vm712, %v464, %v776
    %v841 = vsel %vm713, %v467, %v777
    %v842 = vsel %vm714, %v472, %v778
    %v843 = vsel %vm715, %v475, %v779
    %v844 = vsel %vm716, %v480, %v780
    %v845 = vsel %vm717, %v483, %v781
    %v846 = vsel %vm718, %v488, %v782
    %v847 = vsel %vm719, %v491, %v783
    %v848 = vsel %vm720, %v496, %v784
    %v849 = vsel %vm721, %v499, %v785
    %v850 = vsel %vm722, %v504, %v786
    %v851 = vsel %vm723, %v507, %v787
    %v852 = vsel %vm724, %v512, %v788
    %v853 = vsel %vm725, %v515, %v789
    %v854 = vsel %vm726, %v520, %v790
    %v855 = vsel %vm727, %v523, %v791
    %v856 = vsel %vm728, %v528, %v792
    %v857 = vsel %vm729, %v531, %v793
    %v858 = vsel %vm730, %v536, %v794
    %v859 = vsel %vm731, %v539, %v795
    %v860 = vsel %vm732, %v544, %v796
    %v861 = vsel %vm733, %v547, %v797
    %v862 = vsel %vm734, %v552, %v798
    %v863 = vsel %vm735, %v555, %v799
    %v864 = vsel %vm736, %v560, %v800
    %v865 = vsel %vm737, %v563, %v801
    %v866 = vsel %vm738, %v568, %v802
    %v867 = vsel %vm739, %v571, %v803
    %v868 = vsel %vm740, %v576, %v804
    %v869 = vsel %vm741, %v579, %v805
    %v870 = vsel %vm742, %v584, %v806
    %v871 = vsel %vm743, %v587, %v807
    %v872 = vsel %vm744, %v592, %v808
    %v873 = vsel %vm745, %v595, %v809
    %v874 = vsel %vm746, %v600, %v810
    %v875 = vsel %vm747, %v603, %v811
    %v876 = vsel %vm748, %v608, %v812
    %v877 = vsel %vm749, %v611, %v813
    %v878 = vsel %vm750, %v616, %v814
    %v879 = vsel %vm751, %v619, %v815
    %v880 = vsel %vm752, %v624, %v816
    %v881 = vsel %vm753, %v627, %v817
    %v882 = vsel %vm754, %v632, %v818
    %v883 = vsel %vm755, %v635, %v819
    %v884 = vsel %vm756, %v640, %v820
    %v885 = vsel %vm757, %v643, %v821
    %v886 = vsel %vm758, %v648, %v822
    %v887 = vsel %vm759, %v651, %v823
    %v888 = vsel %vm760, %v656, %v824
    %v889 = vsel %vm761, %v659, %v825
    %v890 = vsel %vm762, %v664, %v826
    %v891 = vsel %vm763, %v667, %v827
    %v892 = vsel %vm764, %v672, %v828
    %v893 = vsel %vm765, %v675, %v829
    %v894 = vsel %vm766, %v680, %v830
    %v895 = vsel %vm767, %v683, %v831
    %v896 = vsel %vm768, %v688, %v832
    %v897 = vsel %vm769, %v691, %v833
    %v898 = vsel %vm770, %v696, %v834
    %v899 = vsel %vm771, %v699, %v835
    %v900 = vsel %vm772, %v704, %v836
    %v901 = vsel %vm773, %v707, %v837
    %v902 = vpack.c.bf16 %v839, %v838
    %v903 = vpack.c.bf16 %v841, %v840
    %v904 = vpack.c.bf16 %v843, %v842
    %v905 = vpack.c.bf16 %v845, %v844
    %v906 = vpack.c.bf16 %v847, %v846
    %v907 = vpack.c.bf16 %v849, %v848
    %v908 = vpack.c.bf16 %v851, %v850
    %v909 = vpack.c.bf16 %v853, %v852
    %v910 = vpack.c.bf16 %v855, %v854
    %v911 = vpack.c.bf16 %v857, %v856
    %v912 = vpack.c.bf16 %v859, %v858
    %v913 = vpack.c.bf16 %v861, %v860
    %v914 = vpack.c.bf16 %v863, %v862
    %v915 = vpack.c.bf16 %v865, %v864
    %v916 = vpack.c.bf16 %v867, %v866
    %v917 = vpack.c.bf16 %v869, %v868
    %v918 = vpack.c.bf16 %v871, %v870
    %v919 = vpack.c.bf16 %v873, %v872
    %v920 = vpack.c.bf16 %v875, %v874
    %v921 = vpack.c.bf16 %v877, %v876
    %v922 = vpack.c.bf16 %v879, %v878
    %v923 = vpack.c.bf16 %v881, %v880
    %v924 = vpack.c.bf16 %v883, %v882
    %v925 = vpack.c.bf16 %v885, %v884
    %v926 = vpack.c.bf16 %v887, %v886
    %v927 = vpack.c.bf16 %v889, %v888
    %v928 = vpack.c.bf16 %v891, %v890
    %v929 = vpack.c.bf16 %v893, %v892
    %v930 = vpack.c.bf16 %v895, %v894
    %v931 = vpack.c.bf16 %v897, %v896
    %v932 = vpack.c.bf16 %v899, %v898
    %v933 = vpack.c.bf16 %v901, %v900
    %v934 = vld [vmem:[#allocation7] sm:$0xf]
    %v935 = vld [vmem:[#allocation7 + $0x4] sm:$0xf]
    %v936 = vld [vmem:[#allocation7 + $0x8] sm:$0xf]
    %v937 = vld [vmem:[#allocation7 + $0xc] sm:$0xf]
    %v938 = vld [vmem:[#allocation7 + $0x10] sm:$0xf]
    %v939 = vld [vmem:[#allocation7 + $0x14] sm:$0xf]
    %v940 = vld [vmem:[#allocation7 + $0x18] sm:$0xf]
    %v941 = vld [vmem:[#allocation7 + $0x1c] sm:$0xf]
    %v942 = vld [vmem:[#allocation7 + $0x20] sm:$0xf]
    %v943 = vld [vmem:[#allocation7 + $0x24] sm:$0xf]
    %v944 = vld [vmem:[#allocation7 + $0x28] sm:$0xf]
    %v945 = vld [vmem:[#allocation7 + $0x2c] sm:$0xf]
    %v946 = vld [vmem:[#allocation7 + $0x30] sm:$0xf]
    %v947 = vld [vmem:[#allocation7 + $0x34] sm:$0xf]
    %v948 = vld [vmem:[#allocation7 + $0x38] sm:$0xf]
    %v949 = vld [vmem:[#allocation7 + $0x3c] sm:$0xf]
    %v950 = vld [vmem:[#allocation8] sm:$0x1]
    %v952 = vlaneseq
    %v953 = vshrl.u32 %v952, 7
    %v954 = vsub.s32 0, %v953
    %v955 = vrot.slane %v950, %v954
    %v973 = vunpack.c.l.b16 %v934
    %v974 = vunpack.c.l.b16 %v935
    %v975 = vunpack.c.l.b16 %v936
    %v976 = vunpack.c.l.b16 %v937
    %v977 = vunpack.c.l.b16 %v938
    %v978 = vunpack.c.l.b16 %v939
    %v979 = vunpack.c.l.b16 %v940
    %v980 = vunpack.c.l.b16 %v941
    %v981 = vunpack.c.l.b16 %v942
    %v982 = vunpack.c.l.b16 %v943
    %v983 = vunpack.c.l.b16 %v944
    %v984 = vunpack.c.l.b16 %v945
    %v985 = vunpack.c.l.b16 %v946
    %v986 = vunpack.c.l.b16 %v947
    %v987 = vunpack.c.l.b16 %v948
    %v988 = vunpack.c.l.b16 %v949
    %v989 = vpack.c.b16 %v974, %v973
    %v990 = vpack.c.b16 %v976, %v975
    %v991 = vpack.c.b16 %v978, %v977
    %v992 = vpack.c.b16 %v980, %v979
    %v993 = vpack.c.b16 %v982, %v981
    %v994 = vpack.c.b16 %v984, %v983
    %v995 = vpack.c.b16 %v986, %v985
    %v996 = vpack.c.b16 %v988, %v987
    %1005 = vmatprep.subr.bf16.mxu0 0
    %1006 = vmatpush1.bf16.msra.mxu0 %v996
    %1007 = vmatprep.subr.bf16.mxu0 0
    %1008 = vmatpush1.bf16.msra.mxu0 %v995
    %1009 = vmatprep.subr.bf16.mxu0 0
    %1010 = vmatpush1.bf16.msra.mxu0 %v994
    %1011 = vmatprep.subr.bf16.mxu0 0
    %1012 = vmatpush1.bf16.msra.mxu0 %v993
    %1013 = vmatprep.subr.bf16.mxu0 0
    %1014 = vmatpush1.bf16.msra.mxu0 %v992
    %1015 = vmatprep.subr.bf16.mxu0 0
    %1016 = vmatpush1.bf16.msra.mxu0 %v991
    %1017 = vmatprep.subr.bf16.mxu0 0
    %1018 = vmatpush1.bf16.msra.mxu0 %v990
    %1019 = vmatprep.subr.bf16.mxu0 0
    %1020 = vmatpush1.bf16.msra.mxu0 %v989
    %1021 = vmatprep.subr.bf16.mxu0 0
    %1022 = vmatpush2.bf16.msra.mxu0 0
    %1023 = vmatprep.subr.bf16.mxu0 0
    %1024 = vmatpush2.bf16.msra.mxu0 0
    %1025 = vmatprep.subr.bf16.mxu0 0
    %1026 = vmatpush2.bf16.msra.mxu0 0
    %1027 = vmatprep.subr.bf16.mxu0 0
    %1028 = vmatpush2.bf16.msra.mxu0 0
    %1029 = vmatprep.subr.bf16.mxu0 0
    %1030 = vmatpush2.bf16.msra.mxu0 0
    %1031 = vmatprep.subr.bf16.mxu0 0
    %1032 = vmatpush2.bf16.msra.mxu0 0
    %1033 = vmatprep.subr.bf16.mxu0 0
    %1034 = vmatpush2.bf16.msra.mxu0 0
    %1035 = vmatprep.subr.bf16.mxu0 0
    %1036 = vmatpush2.bf16.msra.mxu0 0
    %1037 = vmatprep.mubr.bf16.mxu0 0
    %1038 = vmatmul.mubr.bf16.gmra.mxu0 %v902
    %v1039 = vpop.f32.mrf.mxu0
    %v1040 = vadd.f32 %v955, %v1039
    %v1041 = vpop.f32.mrf.mxu0
    %v1042 = vpop.f32.mrf.mxu0
    %v1043 = vadd.f32 %v955, %v1042
    %v1044 = vpop.f32.mrf.mxu0
    %1045 = vmatprep.mubr.bf16.mxu0 0
    %1046 = vmatmul.mubr.bf16.gmra.mxu0 %v903
    %v1047 = vpop.f32.mrf.mxu0
    %v1048 = vadd.f32 %v955, %v1047
    %v1049 = vpop.f32.mrf.mxu0
    %v1050 = vpop.f32.mrf.mxu0
    %v1051 = vadd.f32 %v955, %v1050
    %v1052 = vpop.f32.mrf.mxu0
    %1053 = vmatprep.mubr.bf16.mxu0 0
    %1054 = vmatmul.mubr.bf16.gmra.mxu0 %v904
    %v1055 = vpop.f32.mrf.mxu0
    %v1056 = vadd.f32 %v955, %v1055
    %v1057 = vpop.f32.mrf.mxu0
    %v1058 = vpop.f32.mrf.mxu0
    %v1059 = vadd.f32 %v955, %v1058
    %v1060 = vpop.f32.mrf.mxu0
    %1061 = vmatprep.mubr.bf16.mxu0 0
    %1062 = vmatmul.mubr.bf16.gmra.mxu0 %v905
    %v1063 = vpop.f32.mrf.mxu0
    %v1064 = vadd.f32 %v955, %v1063
    %v1065 = vpop.f32.mrf.mxu0
    %v1066 = vpop.f32.mrf.mxu0
    %v1067 = vadd.f32 %v955, %v1066
    %v1068 = vpop.f32.mrf.mxu0
    %1069 = vmatprep.mubr.bf16.mxu0 0
    %1070 = vmatmul.mubr.bf16.gmra.mxu0 %v906
    %v1071 = vpop.f32.mrf.mxu0
    %v1072 = vadd.f32 %v955, %v1071
    %v1073 = vpop.f32.mrf.mxu0
    %v1074 = vpop.f32.mrf.mxu0
    %v1075 = vadd.f32 %v955, %v1074
    %v1076 = vpop.f32.mrf.mxu0
    %1077 = vmatprep.mubr.bf16.mxu0 0
    %1078 = vmatmul.mubr.bf16.gmra.mxu0 %v907
    %v1079 = vpop.f32.mrf.mxu0
    %v1080 = vadd.f32 %v955, %v1079
    %v1081 = vpop.f32.mrf.mxu0
    %v1082 = vpop.f32.mrf.mxu0
    %v1083 = vadd.f32 %v955, %v1082
    %v1084 = vpop.f32.mrf.mxu0
    %1085 = vmatprep.mubr.bf16.mxu0 0
    %1086 = vmatmul.mubr.bf16.gmra.mxu0 %v908
    %v1087 = vpop.f32.mrf.mxu0
    %v1088 = vadd.f32 %v955, %v1087
    %v1089 = vpop.f32.mrf.mxu0
    %v1090 = vpop.f32.mrf.mxu0
    %v1091 = vadd.f32 %v955, %v1090
    %v1092 = vpop.f32.mrf.mxu0
    %1093 = vmatprep.mubr.bf16.mxu0 0
    %1094 = vmatmul.mubr.bf16.gmra.mxu0 %v909
    %v1095 = vpop.f32.mrf.mxu0
    %v1096 = vadd.f32 %v955, %v1095
    %v1097 = vpop.f32.mrf.mxu0
    %v1098 = vpop.f32.mrf.mxu0
    %v1099 = vadd.f32 %v955, %v1098
    %v1100 = vpop.f32.mrf.mxu0
    %1101 = vmatprep.mubr.bf16.mxu0 0
    %1102 = vmatmul.mubr.bf16.gmra.mxu0 %v910
    %v1103 = vpop.f32.mrf.mxu0
    %v1104 = vadd.f32 %v955, %v1103
    %v1105 = vpop.f32.mrf.mxu0
    %v1106 = vpop.f32.mrf.mxu0
    %v1107 = vadd.f32 %v955, %v1106
    %v1108 = vpop.f32.mrf.mxu0
    %1109 = vmatprep.mubr.bf16.mxu0 0
    %1110 = vmatmul.mubr.bf16.gmra.mxu0 %v911
    %v1111 = vpop.f32.mrf.mxu0
    %v1112 = vadd.f32 %v955, %v1111
    %v1113 = vpop.f32.mrf.mxu0
    %v1114 = vpop.f32.mrf.mxu0
    %v1115 = vadd.f32 %v955, %v1114
    %v1116 = vpop.f32.mrf.mxu0
    %1117 = vmatprep.mubr.bf16.mxu0 0
    %1118 = vmatmul.mubr.bf16.gmra.mxu0 %v912
    %v1119 = vpop.f32.mrf.mxu0
    %v1120 = vadd.f32 %v955, %v1119
    %v1121 = vpop.f32.mrf.mxu0
    %v1122 = vpop.f32.mrf.mxu0
    %v1123 = vadd.f32 %v955, %v1122
    %v1124 = vpop.f32.mrf.mxu0
    %1125 = vmatprep.mubr.bf16.mxu0 0
    %1126 = vmatmul.mubr.bf16.gmra.mxu0 %v913
    %v1127 = vpop.f32.mrf.mxu0
    %v1128 = vadd.f32 %v955, %v1127
    %v1129 = vpop.f32.mrf.mxu0
    %v1130 = vpop.f32.mrf.mxu0
    %v1131 = vadd.f32 %v955, %v1130
    %v1132 = vpop.f32.mrf.mxu0
    %1133 = vmatprep.mubr.bf16.mxu0 0
    %1134 = vmatmul.mubr.bf16.gmra.mxu0 %v914
    %v1135 = vpop.f32.mrf.mxu0
    %v1136 = vadd.f32 %v955, %v1135
    %v1137 = vpop.f32.mrf.mxu0
    %v1138 = vpop.f32.mrf.mxu0
    %v1139 = vadd.f32 %v955, %v1138
    %v1140 = vpop.f32.mrf.mxu0
    %1141 = vmatprep.mubr.bf16.mxu0 0
    %1142 = vmatmul.mubr.bf16.gmra.mxu0 %v915
    %v1143 = vpop.f32.mrf.mxu0
    %v1144 = vadd.f32 %v955, %v1143
    %v1145 = vpop.f32.mrf.mxu0
    %v1146 = vpop.f32.mrf.mxu0
    %v1147 = vadd.f32 %v955, %v1146
    %v1148 = vpop.f32.mrf.mxu0
    %1149 = vmatprep.mubr.bf16.mxu0 0
    %1150 = vmatmul.mubr.bf16.gmra.mxu0 %v916
    %v1151 = vpop.f32.mrf.mxu0
    %v1152 = vadd.f32 %v955, %v1151
    %v1153 = vpop.f32.mrf.mxu0
    %v1154 = vpop.f32.mrf.mxu0
    %v1155 = vadd.f32 %v955, %v1154
    %v1156 = vpop.f32.mrf.mxu0
    %1157 = vmatprep.mubr.bf16.mxu0 0
    %1158 = vmatmul.mubr.bf16.gmra.mxu0 %v917
    %v1159 = vpop.f32.mrf.mxu0
    %v1160 = vadd.f32 %v955, %v1159
    %v1161 = vpop.f32.mrf.mxu0
    %v1162 = vpop.f32.mrf.mxu0
    %v1163 = vadd.f32 %v955, %v1162
    %v1164 = vpop.f32.mrf.mxu0
    %1165 = vmatprep.mubr.bf16.mxu0 0
    %1166 = vmatmul.mubr.bf16.gmra.mxu0 %v918
    %v1167 = vpop.f32.mrf.mxu0
    %v1168 = vadd.f32 %v955, %v1167
    %v1169 = vpop.f32.mrf.mxu0
    %v1170 = vpop.f32.mrf.mxu0
    %v1171 = vadd.f32 %v955, %v1170
    %v1172 = vpop.f32.mrf.mxu0
    %1173 = vmatprep.mubr.bf16.mxu0 0
    %1174 = vmatmul.mubr.bf16.gmra.mxu0 %v919
    %v1175 = vpop.f32.mrf.mxu0
    %v1176 = vadd.f32 %v955, %v1175
    %v1177 = vpop.f32.mrf.mxu0
    %v1178 = vpop.f32.mrf.mxu0
    %v1179 = vadd.f32 %v955, %v1178
    %v1180 = vpop.f32.mrf.mxu0
    %1181 = vmatprep.mubr.bf16.mxu0 0
    %1182 = vmatmul.mubr.bf16.gmra.mxu0 %v920
    %v1183 = vpop.f32.mrf.mxu0
    %v1184 = vadd.f32 %v955, %v1183
    %v1185 = vpop.f32.mrf.mxu0
    %v1186 = vpop.f32.mrf.mxu0
    %v1187 = vadd.f32 %v955, %v1186
    %v1188 = vpop.f32.mrf.mxu0
    %1189 = vmatprep.mubr.bf16.mxu0 0
    %1190 = vmatmul.mubr.bf16.gmra.mxu0 %v921
    %v1191 = vpop.f32.mrf.mxu0
    %v1192 = vadd.f32 %v955, %v1191
    %v1193 = vpop.f32.mrf.mxu0
    %v1194 = vpop.f32.mrf.mxu0
    %v1195 = vadd.f32 %v955, %v1194
    %v1196 = vpop.f32.mrf.mxu0
    %1197 = vmatprep.mubr.bf16.mxu0 0
    %1198 = vmatmul.mubr.bf16.gmra.mxu0 %v922
    %v1199 = vpop.f32.mrf.mxu0
    %v1200 = vadd.f32 %v955, %v1199
    %v1201 = vpop.f32.mrf.mxu0
    %v1202 = vpop.f32.mrf.mxu0
    %v1203 = vadd.f32 %v955, %v1202
    %v1204 = vpop.f32.mrf.mxu0
    %1205 = vmatprep.mubr.bf16.mxu0 0
    %1206 = vmatmul.mubr.bf16.gmra.mxu0 %v923
    %v1207 = vpop.f32.mrf.mxu0
    %v1208 = vadd.f32 %v955, %v1207
    %v1209 = vpop.f32.mrf.mxu0
    %v1210 = vpop.f32.mrf.mxu0
    %v1211 = vadd.f32 %v955, %v1210
    %v1212 = vpop.f32.mrf.mxu0
    %1213 = vmatprep.mubr.bf16.mxu0 0
    %1214 = vmatmul.mubr.bf16.gmra.mxu0 %v924
    %v1215 = vpop.f32.mrf.mxu0
    %v1216 = vadd.f32 %v955, %v1215
    %v1217 = vpop.f32.mrf.mxu0
    %v1218 = vpop.f32.mrf.mxu0
    %v1219 = vadd.f32 %v955, %v1218
    %v1220 = vpop.f32.mrf.mxu0
    %1221 = vmatprep.mubr.bf16.mxu0 0
    %1222 = vmatmul.mubr.bf16.gmra.mxu0 %v925
    %v1223 = vpop.f32.mrf.mxu0
    %v1224 = vadd.f32 %v955, %v1223
    %v1225 = vpop.f32.mrf.mxu0
    %v1226 = vpop.f32.mrf.mxu0
    %v1227 = vadd.f32 %v955, %v1226
    %v1228 = vpop.f32.mrf.mxu0
    %1229 = vmatprep.mubr.bf16.mxu0 0
    %1230 = vmatmul.mubr.bf16.gmra.mxu0 %v926
    %v1231 = vpop.f32.mrf.mxu0
    %v1232 = vadd.f32 %v955, %v1231
    %v1233 = vpop.f32.mrf.mxu0
    %v1234 = vpop.f32.mrf.mxu0
    %v1235 = vadd.f32 %v955, %v1234
    %v1236 = vpop.f32.mrf.mxu0
    %1237 = vmatprep.mubr.bf16.mxu0 0
    %1238 = vmatmul.mubr.bf16.gmra.mxu0 %v927
    %v1239 = vpop.f32.mrf.mxu0
    %v1240 = vadd.f32 %v955, %v1239
    %v1241 = vpop.f32.mrf.mxu0
    %v1242 = vpop.f32.mrf.mxu0
    %v1243 = vadd.f32 %v955, %v1242
    %v1244 = vpop.f32.mrf.mxu0
    %1245 = vmatprep.mubr.bf16.mxu0 0
    %1246 = vmatmul.mubr.bf16.gmra.mxu0 %v928
    %v1247 = vpop.f32.mrf.mxu0
    %v1248 = vadd.f32 %v955, %v1247
    %v1249 = vpop.f32.mrf.mxu0
    %v1250 = vpop.f32.mrf.mxu0
    %v1251 = vadd.f32 %v955, %v1250
    %v1252 = vpop.f32.mrf.mxu0
    %1253 = vmatprep.mubr.bf16.mxu0 0
    %1254 = vmatmul.mubr.bf16.gmra.mxu0 %v929
    %v1255 = vpop.f32.mrf.mxu0
    %v1256 = vadd.f32 %v955, %v1255
    %v1257 = vpop.f32.mrf.mxu0
    %v1258 = vpop.f32.mrf.mxu0
    %v1259 = vadd.f32 %v955, %v1258
    %v1260 = vpop.f32.mrf.mxu0
    %1261 = vmatprep.mubr.bf16.mxu0 0
    %1262 = vmatmul.mubr.bf16.gmra.mxu0 %v930
    %v1263 = vpop.f32.mrf.mxu0
    %v1264 = vadd.f32 %v955, %v1263
    %v1265 = vpop.f32.mrf.mxu0
    %v1266 = vpop.f32.mrf.mxu0
    %v1267 = vadd.f32 %v955, %v1266
    %v1268 = vpop.f32.mrf.mxu0
    %1269 = vmatprep.mubr.bf16.mxu0 0
    %1270 = vmatmul.mubr.bf16.gmra.mxu0 %v931
    %v1271 = vpop.f32.mrf.mxu0
    %v1272 = vadd.f32 %v955, %v1271
    %v1273 = vpop.f32.mrf.mxu0
    %v1274 = vpop.f32.mrf.mxu0
    %v1275 = vadd.f32 %v955, %v1274
    %v1276 = vpop.f32.mrf.mxu0
    %1277 = vmatprep.mubr.bf16.mxu0 0
    %1278 = vmatmul.mubr.bf16.gmra.mxu0 %v932
    %v1279 = vpop.f32.mrf.mxu0
    %v1280 = vadd.f32 %v955, %v1279
    %v1281 = vpop.f32.mrf.mxu0
    %v1282 = vpop.f32.mrf.mxu0
    %v1283 = vadd.f32 %v955, %v1282
    %v1284 = vpop.f32.mrf.mxu0
    %1285 = vmatprep.mubr.bf16.mxu0 0
    %1286 = vmatmul.mubr.bf16.gmra.mxu0 %v933
    %v1287 = vpop.f32.mrf.mxu0
    %v1288 = vadd.f32 %v955, %v1287
    %v1289 = vpop.f32.mrf.mxu0
    %v1290 = vpop.f32.mrf.mxu0
    %v1291 = vadd.f32 %v955, %v1290
    %v1292 = vpop.f32.mrf.mxu0
    %1293 = vdwg.mxu0
    %v1294 = vld [vmem:[%s5] sm:$0xff]
    %vm1295 = vcmp.gt.f32.partialorder %v1294, 0.5
    %v1296 = vsel %vm1295, 1, 0
    %v1297 = vlaneseq
    %v1298 = vshrl.u32 %v1297, 7
    %v1299 = vsub.s32 2, %v1298
    %v1300 = vrot.slane %v1296, %v1299
    %vm1301 = vcmp.eq.s32.totalorder %v1300, 1
    %v1302 = vsel %vm1301, %v1040, -1e+30
    %v1303 = vsel %vm1301, %v1043, -1e+30
    %v1304 = vsel %vm1301, %v1048, -1e+30
    %v1305 = vsel %vm1301, %v1051, -1e+30
    %v1306 = vsel %vm1301, %v1056, -1e+30
    %v1307 = vsel %vm1301, %v1059, -1e+30
    %v1308 = vsel %vm1301, %v1064, -1e+30
    %v1309 = vsel %vm1301, %v1067, -1e+30
    %v1310 = vsel %vm1301, %v1072, -1e+30
    %v1311 = vsel %vm1301, %v1075, -1e+30
    %v1312 = vsel %vm1301, %v1080, -1e+30
    %v1313 = vsel %vm1301, %v1083, -1e+30
    %v1314 = vsel %vm1301, %v1088, -1e+30
    %v1315 = vsel %vm1301, %v1091, -1e+30
    %v1316 = vsel %vm1301, %v1096, -1e+30
    %v1317 = vsel %vm1301, %v1099, -1e+30
    %v1318 = vsel %vm1301, %v1104, -1e+30
    %v1319 = vsel %vm1301, %v1107, -1e+30
    %v1320 = vsel %vm1301, %v1112, -1e+30
    %v1321 = vsel %vm1301, %v1115, -1e+30
    %v1322 = vsel %vm1301, %v1120, -1e+30
    %v1323 = vsel %vm1301, %v1123, -1e+30
    %v1324 = vsel %vm1301, %v1128, -1e+30
    %v1325 = vsel %vm1301, %v1131, -1e+30
    %v1326 = vsel %vm1301, %v1136, -1e+30
    %v1327 = vsel %vm1301, %v1139, -1e+30
    %v1328 = vsel %vm1301, %v1144, -1e+30
    %v1329 = vsel %vm1301, %v1147, -1e+30
    %v1330 = vsel %vm1301, %v1152, -1e+30
    %v1331 = vsel %vm1301, %v1155, -1e+30
    %v1332 = vsel %vm1301, %v1160, -1e+30
    %v1333 = vsel %vm1301, %v1163, -1e+30
    %v1334 = vsel %vm1301, %v1168, -1e+30
    %v1335 = vsel %vm1301, %v1171, -1e+30
    %v1336 = vsel %vm1301, %v1176, -1e+30
    %v1337 = vsel %vm1301, %v1179, -1e+30
    %v1338 = vsel %vm1301, %v1184, -1e+30
    %v1339 = vsel %vm1301, %v1187, -1e+30
    %v1340 = vsel %vm1301, %v1192, -1e+30
    %v1341 = vsel %vm1301, %v1195, -1e+30
    %v1342 = vsel %vm1301, %v1200, -1e+30
    %v1343 = vsel %vm1301, %v1203, -1e+30
    %v1344 = vsel %vm1301, %v1208, -1e+30
    %v1345 = vsel %vm1301, %v1211, -1e+30
    %v1346 = vsel %vm1301, %v1216, -1e+30
    %v1347 = vsel %vm1301, %v1219, -1e+30
    %v1348 = vsel %vm1301, %v1224, -1e+30
    %v1349 = vsel %vm1301, %v1227, -1e+30
    %v1350 = vsel %vm1301, %v1232, -1e+30
    %v1351 = vsel %vm1301, %v1235, -1e+30
    %v1352 = vsel %vm1301, %v1240, -1e+30
    %v1353 = vsel %vm1301, %v1243, -1e+30
    %v1354 = vsel %vm1301, %v1248, -1e+30
    %v1355 = vsel %vm1301, %v1251, -1e+30
    %v1356 = vsel %vm1301, %v1256, -1e+30
    %v1357 = vsel %vm1301, %v1259, -1e+30
    %v1358 = vsel %vm1301, %v1264, -1e+30
    %v1359 = vsel %vm1301, %v1267, -1e+30
    %v1360 = vsel %vm1301, %v1272, -1e+30
    %v1361 = vsel %vm1301, %v1275, -1e+30
    %v1362 = vsel %vm1301, %v1280, -1e+30
    %v1363 = vsel %vm1301, %v1283, -1e+30
    %v1364 = vsel %vm1301, %v1288, -1e+30
    %v1365 = vsel %vm1301, %v1291, -1e+30
    %1366 = vmax.xlane.f32.xlu0 %v1302
    %v1367 = vpop.xlane.xlu0 %1366
    %1368 = vmax.xlane.f32.xlu0 %v1303
    %v1369 = vpop.xlane.xlu0 %1368
    %1370 = vmax.xlane.f32.xlu0 %v1304
    %v1371 = vpop.xlane.xlu0 %1370
    %1372 = vmax.xlane.f32.xlu0 %v1305
    %v1373 = vpop.xlane.xlu0 %1372
    %1374 = vmax.xlane.f32.xlu0 %v1306
    %v1375 = vpop.xlane.xlu0 %1374
    %1376 = vmax.xlane.f32.xlu0 %v1307
    %v1377 = vpop.xlane.xlu0 %1376
    %1378 = vmax.xlane.f32.xlu0 %v1308
    %v1379 = vpop.xlane.xlu0 %1378
    %1380 = vmax.xlane.f32.xlu0 %v1309
    %v1381 = vpop.xlane.xlu0 %1380
    %1382 = vmax.xlane.f32.xlu0 %v1310
    %v1383 = vpop.xlane.xlu0 %1382
    %1384 = vmax.xlane.f32.xlu0 %v1311
    %v1385 = vpop.xlane.xlu0 %1384
    %1386 = vmax.xlane.f32.xlu0 %v1312
    %v1387 = vpop.xlane.xlu0 %1386
    %1388 = vmax.xlane.f32.xlu0 %v1313
    %v1389 = vpop.xlane.xlu0 %1388
    %1390 = vmax.xlane.f32.xlu0 %v1314
    %v1391 = vpop.xlane.xlu0 %1390
    %1392 = vmax.xlane.f32.xlu0 %v1315
    %v1393 = vpop.xlane.xlu0 %1392
    %1394 = vmax.xlane.f32.xlu0 %v1316
    %v1395 = vpop.xlane.xlu0 %1394
    %1396 = vmax.xlane.f32.xlu0 %v1317
    %v1397 = vpop.xlane.xlu0 %1396
    %1398 = vmax.xlane.f32.xlu0 %v1318
    %v1399 = vpop.xlane.xlu0 %1398
    %1400 = vmax.xlane.f32.xlu0 %v1319
    %v1401 = vpop.xlane.xlu0 %1400
    %1402 = vmax.xlane.f32.xlu0 %v1320
    %v1403 = vpop.xlane.xlu0 %1402
    %1404 = vmax.xlane.f32.xlu0 %v1321
    %v1405 = vpop.xlane.xlu0 %1404
    %1406 = vmax.xlane.f32.xlu0 %v1322
    %v1407 = vpop.xlane.xlu0 %1406
    %1408 = vmax.xlane.f32.xlu0 %v1323
    %v1409 = vpop.xlane.xlu0 %1408
    %1410 = vmax.xlane.f32.xlu0 %v1324
    %v1411 = vpop.xlane.xlu0 %1410
    %1412 = vmax.xlane.f32.xlu0 %v1325
    %v1413 = vpop.xlane.xlu0 %1412
    %1414 = vmax.xlane.f32.xlu0 %v1326
    %v1415 = vpop.xlane.xlu0 %1414
    %1416 = vmax.xlane.f32.xlu0 %v1327
    %v1417 = vpop.xlane.xlu0 %1416
    %1418 = vmax.xlane.f32.xlu0 %v1328
    %v1419 = vpop.xlane.xlu0 %1418
    %1420 = vmax.xlane.f32.xlu0 %v1329
    %v1421 = vpop.xlane.xlu0 %1420
    %1422 = vmax.xlane.f32.xlu0 %v1330
    %v1423 = vpop.xlane.xlu0 %1422
    %1424 = vmax.xlane.f32.xlu0 %v1331
    %v1425 = vpop.xlane.xlu0 %1424
    %1426 = vmax.xlane.f32.xlu0 %v1332
    %v1427 = vpop.xlane.xlu0 %1426
    %1428 = vmax.xlane.f32.xlu0 %v1333
    %v1429 = vpop.xlane.xlu0 %1428
    %1430 = vmax.xlane.f32.xlu0 %v1334
    %v1431 = vpop.xlane.xlu0 %1430
    %1432 = vmax.xlane.f32.xlu0 %v1335
    %v1433 = vpop.xlane.xlu0 %1432
    %1434 = vmax.xlane.f32.xlu0 %v1336
    %v1435 = vpop.xlane.xlu0 %1434
    %1436 = vmax.xlane.f32.xlu0 %v1337
    %v1437 = vpop.xlane.xlu0 %1436
    %1438 = vmax.xlane.f32.xlu0 %v1338
    %v1439 = vpop.xlane.xlu0 %1438
    %1440 = vmax.xlane.f32.xlu0 %v1339
    %v1441 = vpop.xlane.xlu0 %1440
    %1442 = vmax.xlane.f32.xlu0 %v1340
    %v1443 = vpop.xlane.xlu0 %1442
    %1444 = vmax.xlane.f32.xlu0 %v1341
    %v1445 = vpop.xlane.xlu0 %1444
    %1446 = vmax.xlane.f32.xlu0 %v1342
    %v1447 = vpop.xlane.xlu0 %1446
    %1448 = vmax.xlane.f32.xlu0 %v1343
    %v1449 = vpop.xlane.xlu0 %1448
    %1450 = vmax.xlane.f32.xlu0 %v1344
    %v1451 = vpop.xlane.xlu0 %1450
    %1452 = vmax.xlane.f32.xlu0 %v1345
    %v1453 = vpop.xlane.xlu0 %1452
    %1454 = vmax.xlane.f32.xlu0 %v1346
    %v1455 = vpop.xlane.xlu0 %1454
    %1456 = vmax.xlane.f32.xlu0 %v1347
    %v1457 = vpop.xlane.xlu0 %1456
    %1458 = vmax.xlane.f32.xlu0 %v1348
    %v1459 = vpop.xlane.xlu0 %1458
    %1460 = vmax.xlane.f32.xlu0 %v1349
    %v1461 = vpop.xlane.xlu0 %1460
    %1462 = vmax.xlane.f32.xlu0 %v1350
    %v1463 = vpop.xlane.xlu0 %1462
    %1464 = vmax.xlane.f32.xlu0 %v1351
    %v1465 = vpop.xlane.xlu0 %1464
    %1466 = vmax.xlane.f32.xlu0 %v1352
    %v1467 = vpop.xlane.xlu0 %1466
    %1468 = vmax.xlane.f32.xlu0 %v1353
    %v1469 = vpop.xlane.xlu0 %1468
    %1470 = vmax.xlane.f32.xlu0 %v1354
    %v1471 = vpop.xlane.xlu0 %1470
    %1472 = vmax.xlane.f32.xlu0 %v1355
    %v1473 = vpop.xlane.xlu0 %1472
    %1474 = vmax.xlane.f32.xlu0 %v1356
    %v1475 = vpop.xlane.xlu0 %1474
    %1476 = vmax.xlane.f32.xlu0 %v1357
    %v1477 = vpop.xlane.xlu0 %1476
    %1478 = vmax.xlane.f32.xlu0 %v1358
    %v1479 = vpop.xlane.xlu0 %1478
    %1480 = vmax.xlane.f32.xlu0 %v1359
    %v1481 = vpop.xlane.xlu0 %1480
    %1482 = vmax.xlane.f32.xlu0 %v1360
    %v1483 = vpop.xlane.xlu0 %1482
    %1484 = vmax.xlane.f32.xlu0 %v1361
    %v1485 = vpop.xlane.xlu0 %1484
    %1486 = vmax.xlane.f32.xlu0 %v1362
    %v1487 = vpop.xlane.xlu0 %1486
    %1488 = vmax.xlane.f32.xlu0 %v1363
    %v1489 = vpop.xlane.xlu0 %1488
    %1490 = vmax.xlane.f32.xlu0 %v1364
    %v1491 = vpop.xlane.xlu0 %1490
    %1492 = vmax.xlane.f32.xlu0 %v1365
    %v1493 = vpop.xlane.xlu0 %1492
    %v1494 = vsel %vm1301, %v1367, 0.0
    %v1495 = vsel %vm1301, %v1369, 0.0
    %v1496 = vsel %vm1301, %v1371, 0.0
    %v1497 = vsel %vm1301, %v1373, 0.0
    %v1498 = vsel %vm1301, %v1375, 0.0
    %v1499 = vsel %vm1301, %v1377, 0.0
    %v1500 = vsel %vm1301, %v1379, 0.0
    %v1501 = vsel %vm1301, %v1381, 0.0
    %v1502 = vsel %vm1301, %v1383, 0.0
    %v1503 = vsel %vm1301, %v1385, 0.0
    %v1504 = vsel %vm1301, %v1387, 0.0
    %v1505 = vsel %vm1301, %v1389, 0.0
    %v1506 = vsel %vm1301, %v1391, 0.0
    %v1507 = vsel %vm1301, %v1393, 0.0
    %v1508 = vsel %vm1301, %v1395, 0.0
    %v1509 = vsel %vm1301, %v1397, 0.0
    %v1510 = vsel %vm1301, %v1399, 0.0
    %v1511 = vsel %vm1301, %v1401, 0.0
    %v1512 = vsel %vm1301, %v1403, 0.0
    %v1513 = vsel %vm1301, %v1405, 0.0
    %v1514 = vsel %vm1301, %v1407, 0.0
    %v1515 = vsel %vm1301, %v1409, 0.0
    %v1516 = vsel %vm1301, %v1411, 0.0
    %v1517 = vsel %vm1301, %v1413, 0.0
    %v1518 = vsel %vm1301, %v1415, 0.0
    %v1519 = vsel %vm1301, %v1417, 0.0
    %v1520 = vsel %vm1301, %v1419, 0.0
    %v1521 = vsel %vm1301, %v1421, 0.0
    %v1522 = vsel %vm1301, %v1423, 0.0
    %v1523 = vsel %vm1301, %v1425, 0.0
    %v1524 = vsel %vm1301, %v1427, 0.0
    %v1525 = vsel %vm1301, %v1429, 0.0
    %v1526 = vsel %vm1301, %v1431, 0.0
    %v1527 = vsel %vm1301, %v1433, 0.0
    %v1528 = vsel %vm1301, %v1435, 0.0
    %v1529 = vsel %vm1301, %v1437, 0.0
    %v1530 = vsel %vm1301, %v1439, 0.0
    %v1531 = vsel %vm1301, %v1441, 0.0
    %v1532 = vsel %vm1301, %v1443, 0.0
    %v1533 = vsel %vm1301, %v1445, 0.0
    %v1534 = vsel %vm1301, %v1447, 0.0
    %v1535 = vsel %vm1301, %v1449, 0.0
    %v1536 = vsel %vm1301, %v1451, 0.0
    %v1537 = vsel %vm1301, %v1453, 0.0
    %v1538 = vsel %vm1301, %v1455, 0.0
    %v1539 = vsel %vm1301, %v1457, 0.0
    %v1540 = vsel %vm1301, %v1459, 0.0
    %v1541 = vsel %vm1301, %v1461, 0.0
    %v1542 = vsel %vm1301, %v1463, 0.0
    %v1543 = vsel %vm1301, %v1465, 0.0
    %v1544 = vsel %vm1301, %v1467, 0.0
    %v1545 = vsel %vm1301, %v1469, 0.0
    %v1546 = vsel %vm1301, %v1471, 0.0
    %v1547 = vsel %vm1301, %v1473, 0.0
    %v1548 = vsel %vm1301, %v1475, 0.0
    %v1549 = vsel %vm1301, %v1477, 0.0
    %v1550 = vsel %vm1301, %v1479, 0.0
    %v1551 = vsel %vm1301, %v1481, 0.0
    %v1552 = vsel %vm1301, %v1483, 0.0
    %v1553 = vsel %vm1301, %v1485, 0.0
    %v1554 = vsel %vm1301, %v1487, 0.0
    %v1555 = vsel %vm1301, %v1489, 0.0
    %v1556 = vsel %vm1301, %v1491, 0.0
    %v1557 = vsel %vm1301, %v1493, 0.0
    %v1558 = vsub.f32 %v1040, %v1494
    %v1559 = vsub.f32 %v1043, %v1495
    %v1560 = vsub.f32 %v1048, %v1496
    %v1561 = vsub.f32 %v1051, %v1497
    %v1562 = vsub.f32 %v1056, %v1498
    %v1563 = vsub.f32 %v1059, %v1499
    %v1564 = vsub.f32 %v1064, %v1500
    %v1565 = vsub.f32 %v1067, %v1501
    %v1566 = vsub.f32 %v1072, %v1502
    %v1567 = vsub.f32 %v1075, %v1503
    %v1568 = vsub.f32 %v1080, %v1504
    %v1569 = vsub.f32 %v1083, %v1505
    %v1570 = vsub.f32 %v1088, %v1506
    %v1571 = vsub.f32 %v1091, %v1507
    %v1572 = vsub.f32 %v1096, %v1508
    %v1573 = vsub.f32 %v1099, %v1509
    %v1574 = vsub.f32 %v1104, %v1510
    %v1575 = vsub.f32 %v1107, %v1511
    %v1576 = vsub.f32 %v1112, %v1512
    %v1577 = vsub.f32 %v1115, %v1513
    %v1578 = vsub.f32 %v1120, %v1514
    %v1579 = vsub.f32 %v1123, %v1515
    %v1580 = vsub.f32 %v1128, %v1516
    %v1581 = vsub.f32 %v1131, %v1517
    %v1582 = vsub.f32 %v1136, %v1518
    %v1583 = vsub.f32 %v1139, %v1519
    %v1584 = vsub.f32 %v1144, %v1520
    %v1585 = vsub.f32 %v1147, %v1521
    %v1586 = vsub.f32 %v1152, %v1522
    %v1587 = vsub.f32 %v1155, %v1523
    %v1588 = vsub.f32 %v1160, %v1524
    %v1589 = vsub.f32 %v1163, %v1525
    %v1590 = vsub.f32 %v1168, %v1526
    %v1591 = vsub.f32 %v1171, %v1527
    %v1592 = vsub.f32 %v1176, %v1528
    %v1593 = vsub.f32 %v1179, %v1529
    %v1594 = vsub.f32 %v1184, %v1530
    %v1595 = vsub.f32 %v1187, %v1531
    %v1596 = vsub.f32 %v1192, %v1532
    %v1597 = vsub.f32 %v1195, %v1533
    %v1598 = vsub.f32 %v1200, %v1534
    %v1599 = vsub.f32 %v1203, %v1535
    %v1600 = vsub.f32 %v1208, %v1536
    %v1601 = vsub.f32 %v1211, %v1537
    %v1602 = vsub.f32 %v1216, %v1538
    %v1603 = vsub.f32 %v1219, %v1539
    %v1604 = vsub.f32 %v1224, %v1540
    %v1605 = vsub.f32 %v1227, %v1541
    %v1606 = vsub.f32 %v1232, %v1542
    %v1607 = vsub.f32 %v1235, %v1543
    %v1608 = vsub.f32 %v1240, %v1544
    %v1609 = vsub.f32 %v1243, %v1545
    %v1610 = vsub.f32 %v1248, %v1546
    %v1611 = vsub.f32 %v1251, %v1547
    %v1612 = vsub.f32 %v1256, %v1548
    %v1613 = vsub.f32 %v1259, %v1549
    %v1614 = vsub.f32 %v1264, %v1550
    %v1615 = vsub.f32 %v1267, %v1551
    %v1616 = vsub.f32 %v1272, %v1552
    %v1617 = vsub.f32 %v1275, %v1553
    %v1618 = vsub.f32 %v1280, %v1554
    %v1619 = vsub.f32 %v1283, %v1555
    %v1620 = vsub.f32 %v1288, %v1556
    %v1621 = vsub.f32 %v1291, %v1557
    %v1622 = vmul.f32 %v1558, 1.442695
    %v1623 = vpow.pop %v1622
    %v1624 = vmul.f32 %v1559, 1.442695
    %v1625 = vpow.pop %v1624
    %v1626 = vmul.f32 %v1560, 1.442695
    %v1627 = vpow.pop %v1626
    %v1628 = vmul.f32 %v1561, 1.442695
    %v1629 = vpow.pop %v1628
    %v1630 = vmul.f32 %v1562, 1.442695
    %v1631 = vpow.pop %v1630
    %v1632 = vmul.f32 %v1563, 1.442695
    %v1633 = vpow.pop %v1632
    %v1634 = vmul.f32 %v1564, 1.442695
    %v1635 = vpow.pop %v1634
    %v1636 = vmul.f32 %v1565, 1.442695
    %v1637 = vpow.pop %v1636
    %v1638 = vmul.f32 %v1566, 1.442695
    %v1639 = vpow.pop %v1638
    %v1640 = vmul.f32 %v1567, 1.442695
    %v1641 = vpow.pop %v1640
    %v1642 = vmul.f32 %v1568, 1.442695
    %v1643 = vpow.pop %v1642
    %v1644 = vmul.f32 %v1569, 1.442695
    %v1645 = vpow.pop %v1644
    %v1646 = vmul.f32 %v1570, 1.442695
    %v1647 = vpow.pop %v1646
    %v1648 = vmul.f32 %v1571, 1.442695
    %v1649 = vpow.pop %v1648
    %v1650 = vmul.f32 %v1572, 1.442695
    %v1651 = vpow.pop %v1650
    %v1652 = vmul.f32 %v1573, 1.442695
    %v1653 = vpow.pop %v1652
    %v1654 = vmul.f32 %v1574, 1.442695
    %v1655 = vpow.pop %v1654
    %v1656 = vmul.f32 %v1575, 1.442695
    %v1657 = vpow.pop %v1656
    %v1658 = vmul.f32 %v1576, 1.442695
    %v1659 = vpow.pop %v1658
    %v1660 = vmul.f32 %v1577, 1.442695
    %v1661 = vpow.pop %v1660
    %v1662 = vmul.f32 %v1578, 1.442695
    %v1663 = vpow.pop %v1662
    %v1664 = vmul.f32 %v1579, 1.442695
    %v1665 = vpow.pop %v1664
    %v1666 = vmul.f32 %v1580, 1.442695
    %v1667 = vpow.pop %v1666
    %v1668 = vmul.f32 %v1581, 1.442695
    %v1669 = vpow.pop %v1668
    %v1670 = vmul.f32 %v1582, 1.442695
    %v1671 = vpow.pop %v1670
    %v1672 = vmul.f32 %v1583, 1.442695
    %v1673 = vpow.pop %v1672
    %v1674 = vmul.f32 %v1584, 1.442695
    %v1675 = vpow.pop %v1674
    %v1676 = vmul.f32 %v1585, 1.442695
    %v1677 = vpow.pop %v1676
    %v1678 = vmul.f32 %v1586, 1.442695
    %v1679 = vpow.pop %v1678
    %v1680 = vmul.f32 %v1587, 1.442695
    %v1681 = vpow.pop %v1680
    %v1682 = vmul.f32 %v1588, 1.442695
    %v1683 = vpow.pop %v1682
    %v1684 = vmul.f32 %v1589, 1.442695
    %v1685 = vpow.pop %v1684
    %v1686 = vmul.f32 %v1590, 1.442695
    %v1687 = vpow.pop %v1686
    %v1688 = vmul.f32 %v1591, 1.442695
    %v1689 = vpow.pop %v1688
    %v1690 = vmul.f32 %v1592, 1.442695
    %v1691 = vpow.pop %v1690
    %v1692 = vmul.f32 %v1593, 1.442695
    %v1693 = vpow.pop %v1692
    %v1694 = vmul.f32 %v1594, 1.442695
    %v1695 = vpow.pop %v1694
    %v1696 = vmul.f32 %v1595, 1.442695
    %v1697 = vpow.pop %v1696
    %v1698 = vmul.f32 %v1596, 1.442695
    %v1699 = vpow.pop %v1698
    %v1700 = vmul.f32 %v1597, 1.442695
    %v1701 = vpow.pop %v1700
    %v1702 = vmul.f32 %v1598, 1.442695
    %v1703 = vpow.pop %v1702
    %v1704 = vmul.f32 %v1599, 1.442695
    %v1705 = vpow.pop %v1704
    %v1706 = vmul.f32 %v1600, 1.442695
    %v1707 = vpow.pop %v1706
    %v1708 = vmul.f32 %v1601, 1.442695
    %v1709 = vpow.pop %v1708
    %v1710 = vmul.f32 %v1602, 1.442695
    %v1711 = vpow.pop %v1710
    %v1712 = vmul.f32 %v1603, 1.442695
    %v1713 = vpow.pop %v1712
    %v1714 = vmul.f32 %v1604, 1.442695
    %v1715 = vpow.pop %v1714
    %v1716 = vmul.f32 %v1605, 1.442695
    %v1717 = vpow.pop %v1716
    %v1718 = vmul.f32 %v1606, 1.442695
    %v1719 = vpow.pop %v1718
    %v1720 = vmul.f32 %v1607, 1.442695
    %v1721 = vpow.pop %v1720
    %v1722 = vmul.f32 %v1608, 1.442695
    %v1723 = vpow.pop %v1722
    %v1724 = vmul.f32 %v1609, 1.442695
    %v1725 = vpow.pop %v1724
    %v1726 = vmul.f32 %v1610, 1.442695
    %v1727 = vpow.pop %v1726
    %v1728 = vmul.f32 %v1611, 1.442695
    %v1729 = vpow.pop %v1728
    %v1730 = vmul.f32 %v1612, 1.442695
    %v1731 = vpow.pop %v1730
    %v1732 = vmul.f32 %v1613, 1.442695
    %v1733 = vpow.pop %v1732
    %v1734 = vmul.f32 %v1614, 1.442695
    %v1735 = vpow.pop %v1734
    %v1736 = vmul.f32 %v1615, 1.442695
    %v1737 = vpow.pop %v1736
    %v1738 = vmul.f32 %v1616, 1.442695
    %v1739 = vpow.pop %v1738
    %v1740 = vmul.f32 %v1617, 1.442695
    %v1741 = vpow.pop %v1740
    %v1742 = vmul.f32 %v1618, 1.442695
    %v1743 = vpow.pop %v1742
    %v1744 = vmul.f32 %v1619, 1.442695
    %v1745 = vpow.pop %v1744
    %v1746 = vmul.f32 %v1620, 1.442695
    %v1747 = vpow.pop %v1746
    %v1748 = vmul.f32 %v1621, 1.442695
    %v1749 = vpow.pop %v1748
    %v1750 = vadd.f32 %v1623, 1.0
    %v1751 = vadd.f32 %v1625, 1.0
    %v1752 = vadd.f32 %v1627, 1.0
    %v1753 = vadd.f32 %v1629, 1.0
    %v1754 = vadd.f32 %v1631, 1.0
    %v1755 = vadd.f32 %v1633, 1.0
    %v1756 = vadd.f32 %v1635, 1.0
    %v1757 = vadd.f32 %v1637, 1.0
    %v1758 = vadd.f32 %v1639, 1.0
    %v1759 = vadd.f32 %v1641, 1.0
    %v1760 = vadd.f32 %v1643, 1.0
    %v1761 = vadd.f32 %v1645, 1.0
    %v1762 = vadd.f32 %v1647, 1.0
    %v1763 = vadd.f32 %v1649, 1.0
    %v1764 = vadd.f32 %v1651, 1.0
    %v1765 = vadd.f32 %v1653, 1.0
    %v1766 = vadd.f32 %v1655, 1.0
    %v1767 = vadd.f32 %v1657, 1.0
    %v1768 = vadd.f32 %v1659, 1.0
    %v1769 = vadd.f32 %v1661, 1.0
    %v1770 = vadd.f32 %v1663, 1.0
    %v1771 = vadd.f32 %v1665, 1.0
    %v1772 = vadd.f32 %v1667, 1.0
    %v1773 = vadd.f32 %v1669, 1.0
    %v1774 = vadd.f32 %v1671, 1.0
    %v1775 = vadd.f32 %v1673, 1.0
    %v1776 = vadd.f32 %v1675, 1.0
    %v1777 = vadd.f32 %v1677, 1.0
    %v1778 = vadd.f32 %v1679, 1.0
    %v1779 = vadd.f32 %v1681, 1.0
    %v1780 = vadd.f32 %v1683, 1.0
    %v1781 = vadd.f32 %v1685, 1.0
    %v1782 = vadd.f32 %v1687, 1.0
    %v1783 = vadd.f32 %v1689, 1.0
    %v1784 = vadd.f32 %v1691, 1.0
    %v1785 = vadd.f32 %v1693, 1.0
    %v1786 = vadd.f32 %v1695, 1.0
    %v1787 = vadd.f32 %v1697, 1.0
    %v1788 = vadd.f32 %v1699, 1.0
    %v1789 = vadd.f32 %v1701, 1.0
    %v1790 = vadd.f32 %v1703, 1.0
    %v1791 = vadd.f32 %v1705, 1.0
    %v1792 = vadd.f32 %v1707, 1.0
    %v1793 = vadd.f32 %v1709, 1.0
    %v1794 = vadd.f32 %v1711, 1.0
    %v1795 = vadd.f32 %v1713, 1.0
    %v1796 = vadd.f32 %v1715, 1.0
    %v1797 = vadd.f32 %v1717, 1.0
    %v1798 = vadd.f32 %v1719, 1.0
    %v1799 = vadd.f32 %v1721, 1.0
    %v1800 = vadd.f32 %v1723, 1.0
    %v1801 = vadd.f32 %v1725, 1.0
    %v1802 = vadd.f32 %v1727, 1.0
    %v1803 = vadd.f32 %v1729, 1.0
    %v1804 = vadd.f32 %v1731, 1.0
    %v1805 = vadd.f32 %v1733, 1.0
    %v1806 = vadd.f32 %v1735, 1.0
    %v1807 = vadd.f32 %v1737, 1.0
    %v1808 = vadd.f32 %v1739, 1.0
    %v1809 = vadd.f32 %v1741, 1.0
    %v1810 = vadd.f32 %v1743, 1.0
    %v1811 = vadd.f32 %v1745, 1.0
    %v1812 = vadd.f32 %v1747, 1.0
    %v1813 = vadd.f32 %v1749, 1.0
    %v1814 = vrcp.pop %v1750
    %v1815 = vrcp.pop %v1751
    %v1816 = vrcp.pop %v1752
    %v1817 = vrcp.pop %v1753
    %v1818 = vrcp.pop %v1754
    %v1819 = vrcp.pop %v1755
    %v1820 = vrcp.pop %v1756
    %v1821 = vrcp.pop %v1757
    %v1822 = vrcp.pop %v1758
    %v1823 = vrcp.pop %v1759
    %v1824 = vrcp.pop %v1760
    %v1825 = vrcp.pop %v1761
    %v1826 = vrcp.pop %v1762
    %v1827 = vrcp.pop %v1763
    %v1828 = vrcp.pop %v1764
    %v1829 = vrcp.pop %v1765
    %v1830 = vrcp.pop %v1766
    %v1831 = vrcp.pop %v1767
    %v1832 = vrcp.pop %v1768
    %v1833 = vrcp.pop %v1769
    %v1834 = vrcp.pop %v1770
    %v1835 = vrcp.pop %v1771
    %v1836 = vrcp.pop %v1772
    %v1837 = vrcp.pop %v1773
    %v1838 = vrcp.pop %v1774
    %v1839 = vrcp.pop %v1775
    %v1840 = vrcp.pop %v1776
    %v1841 = vrcp.pop %v1777
    %v1842 = vrcp.pop %v1778
    %v1843 = vrcp.pop %v1779
    %v1844 = vrcp.pop %v1780
    %v1845 = vrcp.pop %v1781
    %v1846 = vrcp.pop %v1782
    %v1847 = vrcp.pop %v1783
    %v1848 = vrcp.pop %v1784
    %v1849 = vrcp.pop %v1785
    %v1850 = vrcp.pop %v1786
    %v1851 = vrcp.pop %v1787
    %v1852 = vrcp.pop %v1788
    %v1853 = vrcp.pop %v1789
    %v1854 = vrcp.pop %v1790
    %v1855 = vrcp.pop %v1791
    %v1856 = vrcp.pop %v1792
    %v1857 = vrcp.pop %v1793
    %v1858 = vrcp.pop %v1794
    %v1859 = vrcp.pop %v1795
    %v1860 = vrcp.pop %v1796
    %v1861 = vrcp.pop %v1797
    %v1862 = vrcp.pop %v1798
    %v1863 = vrcp.pop %v1799
    %v1864 = vrcp.pop %v1800
    %v1865 = vrcp.pop %v1801
    %v1866 = vrcp.pop %v1802
    %v1867 = vrcp.pop %v1803
    %v1868 = vrcp.pop %v1804
    %v1869 = vrcp.pop %v1805
    %v1870 = vrcp.pop %v1806
    %v1871 = vrcp.pop %v1807
    %v1872 = vrcp.pop %v1808
    %v1873 = vrcp.pop %v1809
    %v1874 = vrcp.pop %v1810
    %v1875 = vrcp.pop %v1811
    %v1876 = vrcp.pop %v1812
    %v1877 = vrcp.pop %v1813
    %v1878 = vsub.f32 1.0, %v1814
    %v1879 = vsub.f32 1.0, %v1815
    %v1880 = vsub.f32 1.0, %v1816
    %v1881 = vsub.f32 1.0, %v1817
    %v1882 = vsub.f32 1.0, %v1818
    %v1883 = vsub.f32 1.0, %v1819
    %v1884 = vsub.f32 1.0, %v1820
    %v1885 = vsub.f32 1.0, %v1821
    %v1886 = vsub.f32 1.0, %v1822
    %v1887 = vsub.f32 1.0, %v1823
    %v1888 = vsub.f32 1.0, %v1824
    %v1889 = vsub.f32 1.0, %v1825
    %v1890 = vsub.f32 1.0, %v1826
    %v1891 = vsub.f32 1.0, %v1827
    %v1892 = vsub.f32 1.0, %v1828
    %v1893 = vsub.f32 1.0, %v1829
    %v1894 = vsub.f32 1.0, %v1830
    %v1895 = vsub.f32 1.0, %v1831
    %v1896 = vsub.f32 1.0, %v1832
    %v1897 = vsub.f32 1.0, %v1833
    %v1898 = vsub.f32 1.0, %v1834
    %v1899 = vsub.f32 1.0, %v1835
    %v1900 = vsub.f32 1.0, %v1836
    %v1901 = vsub.f32 1.0, %v1837
    %v1902 = vsub.f32 1.0, %v1838
    %v1903 = vsub.f32 1.0, %v1839
    %v1904 = vsub.f32 1.0, %v1840
    %v1905 = vsub.f32 1.0, %v1841
    %v1906 = vsub.f32 1.0, %v1842
    %v1907 = vsub.f32 1.0, %v1843
    %v1908 = vsub.f32 1.0, %v1844
    %v1909 = vsub.f32 1.0, %v1845
    %v1910 = vsub.f32 1.0, %v1846
    %v1911 = vsub.f32 1.0, %v1847
    %v1912 = vsub.f32 1.0, %v1848
    %v1913 = vsub.f32 1.0, %v1849
    %v1914 = vsub.f32 1.0, %v1850
    %v1915 = vsub.f32 1.0, %v1851
    %v1916 = vsub.f32 1.0, %v1852
    %v1917 = vsub.f32 1.0, %v1853
    %v1918 = vsub.f32 1.0, %v1854
    %v1919 = vsub.f32 1.0, %v1855
    %v1920 = vsub.f32 1.0, %v1856
    %v1921 = vsub.f32 1.0, %v1857
    %v1922 = vsub.f32 1.0, %v1858
    %v1923 = vsub.f32 1.0, %v1859
    %v1924 = vsub.f32 1.0, %v1860
    %v1925 = vsub.f32 1.0, %v1861
    %v1926 = vsub.f32 1.0, %v1862
    %v1927 = vsub.f32 1.0, %v1863
    %v1928 = vsub.f32 1.0, %v1864
    %v1929 = vsub.f32 1.0, %v1865
    %v1930 = vsub.f32 1.0, %v1866
    %v1931 = vsub.f32 1.0, %v1867
    %v1932 = vsub.f32 1.0, %v1868
    %v1933 = vsub.f32 1.0, %v1869
    %v1934 = vsub.f32 1.0, %v1870
    %v1935 = vsub.f32 1.0, %v1871
    %v1936 = vsub.f32 1.0, %v1872
    %v1937 = vsub.f32 1.0, %v1873
    %v1938 = vsub.f32 1.0, %v1874
    %v1939 = vsub.f32 1.0, %v1875
    %v1940 = vsub.f32 1.0, %v1876
    %v1941 = vsub.f32 1.0, %v1877
    %v1942 = vld [vmem:[#allocation10] sm:$0xff]
    %v1943 = vld [vmem:[#allocation10 + $0x8] sm:$0xff]
    %v1944 = vld [vmem:[#allocation10 + $0x10] sm:$0xff]
    %v1945 = vld [vmem:[#allocation10 + $0x18] sm:$0xff]
    %v1946 = vld [vmem:[#allocation10 + $0x20] sm:$0xff]
    %v1947 = vld [vmem:[#allocation10 + $0x28] sm:$0xff]
    %v1948 = vld [vmem:[#allocation10 + $0x30] sm:$0xff]
    %v1949 = vld [vmem:[#allocation10 + $0x38] sm:$0xff]
    %v1950 = vld [vmem:[#allocation10 + $0x40] sm:$0xff]
    %v1951 = vld [vmem:[#allocation10 + $0x48] sm:$0xff]
    %v1952 = vld [vmem:[#allocation10 + $0x50] sm:$0xff]
    %v1953 = vld [vmem:[#allocation10 + $0x58] sm:$0xff]
    %v1954 = vld [vmem:[#allocation10 + $0x60] sm:$0xff]
    %v1955 = vld [vmem:[#allocation10 + $0x68] sm:$0xff]
    %v1956 = vld [vmem:[#allocation10 + $0x70] sm:$0xff]
    %v1957 = vld [vmem:[#allocation10 + $0x78] sm:$0xff]
    %v1958 = vlaneseq
    %v1959 = vshrl.u32 %v1958, 7
    %v1960 = vsub.s32 3, %v1959
    %v1961 = vrot.slane %v1294, %v1960
    %1962 = vmatprep.subr.mxu0 0.0
    %1963 = vmatpush1.msra.mxu0 %v1957
    %1964 = vmatprep.subr.mxu0 0.0
    %1965 = vmatpush1.msra.mxu0 %v1956
    %1966 = vmatprep.subr.mxu0 0.0
    %1967 = vmatpush1.msra.mxu0 %v1955
    %1968 = vmatprep.subr.mxu0 0.0
    %1969 = vmatpush1.msra.mxu0 %v1954
    %1970 = vmatprep.subr.mxu0 0.0
    %1971 = vmatpush1.msra.mxu0 %v1953
    %1972 = vmatprep.subr.mxu0 0.0
    %1973 = vmatpush1.msra.mxu0 %v1952
    %1974 = vmatprep.subr.mxu0 0.0
    %1975 = vmatpush1.msra.mxu0 %v1951
    %1976 = vmatprep.subr.mxu0 0.0
    %1977 = vmatpush1.msra.mxu0 %v1950
    %1978 = vmatprep.subr.mxu0 0.0
    %1979 = vmatpush1.msra.mxu0 %v1949
    %1980 = vmatprep.subr.mxu0 0.0
    %1981 = vmatpush1.msra.mxu0 %v1948
    %1982 = vmatprep.subr.mxu0 0.0
    %1983 = vmatpush1.msra.mxu0 %v1947
    %1984 = vmatprep.subr.mxu0 0.0
    %1985 = vmatpush1.msra.mxu0 %v1946
    %1986 = vmatprep.subr.mxu0 0.0
    %1987 = vmatpush1.msra.mxu0 %v1945
    %1988 = vmatprep.subr.mxu0 0.0
    %1989 = vmatpush1.msra.mxu0 %v1944
    %1990 = vmatprep.subr.mxu0 0.0
    %1991 = vmatpush1.msra.mxu0 %v1943
    %1992 = vmatprep.subr.mxu0 0.0
    %1993 = vmatpush1.msra.mxu0 %v1942
    %1994 = vmatprep.subr.mxu0 0.0
    %1995 = vmatpush2.msra.mxu0 0.0
    %1996 = vmatprep.subr.mxu0 0.0
    %1997 = vmatpush2.msra.mxu0 0.0
    %1998 = vmatprep.subr.mxu0 0.0
    %1999 = vmatpush2.msra.mxu0 0.0
    %2000 = vmatprep.subr.mxu0 0.0
    %2001 = vmatpush2.msra.mxu0 0.0
    %2002 = vmatprep.subr.mxu0 0.0
    %2003 = vmatpush2.msra.mxu0 0.0
    %2004 = vmatprep.subr.mxu0 0.0
    %2005 = vmatpush2.msra.mxu0 0.0
    %2006 = vmatprep.subr.mxu0 0.0
    %2007 = vmatpush2.msra.mxu0 0.0
    %2008 = vmatprep.subr.mxu0 0.0
    %2009 = vmatpush2.msra.mxu0 0.0
    %2010 = vmatprep.subr.mxu0 0.0
    %2011 = vmatpush2.msra.mxu0 0.0
    %2012 = vmatprep.subr.mxu0 0.0
    %2013 = vmatpush2.msra.mxu0 0.0
    %2014 = vmatprep.subr.mxu0 0.0
    %2015 = vmatpush2.msra.mxu0 0.0
    %2016 = vmatprep.subr.mxu0 0.0
    %2017 = vmatpush2.msra.mxu0 0.0
    %2018 = vmatprep.subr.mxu0 0.0
    %2019 = vmatpush2.msra.mxu0 0.0
    %2020 = vmatprep.subr.mxu0 0.0
    %2021 = vmatpush2.msra.mxu0 0.0
    %2022 = vmatprep.subr.mxu0 0.0
    %2023 = vmatpush2.msra.mxu0 0.0
    %2024 = vmatprep.subr.mxu0 0.0
    %2025 = vmatpush2.msra.mxu0 0.0
    %2026 = vmatprep.mubr.f32.mxu0 0.0
    %2027 = vmatmul.mubr.f32.gmra.mxu0 %v1623
    %v2028 = vpop.f32.mrf.mxu0
    %v2029 = vadd.f32 %v1961, %v2028
    %v2030 = vpop.f32.mrf.mxu0
    %2031 = vmatprep.mubr.f32.mxu0 0.0
    %2032 = vmatmul.mubr.f32.gmra.mxu0 %v1625
    %v2033 = vpop.f32.mrf.mxu0
    %v2034 = vadd.f32 %v1961, %v2033
    %v2035 = vpop.f32.mrf.mxu0
    %2036 = vmatprep.mubr.f32.mxu0 0.0
    %2037 = vmatmul.mubr.f32.gmra.mxu0 %v1627
    %v2038 = vpop.f32.mrf.mxu0
    %v2039 = vadd.f32 %v1961, %v2038
    %v2040 = vpop.f32.mrf.mxu0
    %2041 = vmatprep.mubr.f32.mxu0 0.0
    %2042 = vmatmul.mubr.f32.gmra.mxu0 %v1629
    %v2043 = vpop.f32.mrf.mxu0
    %v2044 = vadd.f32 %v1961, %v2043
    %v2045 = vpop.f32.mrf.mxu0
    %2046 = vmatprep.mubr.f32.mxu0 0.0
    %2047 = vmatmul.mubr.f32.gmra.mxu0 %v1631
    %v2048 = vpop.f32.mrf.mxu0
    %v2049 = vadd.f32 %v1961, %v2048
    %v2050 = vpop.f32.mrf.mxu0
    %2051 = vmatprep.mubr.f32.mxu0 0.0
    %2052 = vmatmul.mubr.f32.gmra.mxu0 %v1633
    %v2053 = vpop.f32.mrf.mxu0
    %v2054 = vadd.f32 %v1961, %v2053
    %v2055 = vpop.f32.mrf.mxu0
    %2056 = vmatprep.mubr.f32.mxu0 0.0
    %2057 = vmatmul.mubr.f32.gmra.mxu0 %v1635
    %v2058 = vpop.f32.mrf.mxu0
    %v2059 = vadd.f32 %v1961, %v2058
    %v2060 = vpop.f32.mrf.mxu0
    %2061 = vmatprep.mubr.f32.mxu0 0.0
    %2062 = vmatmul.mubr.f32.gmra.mxu0 %v1637
    %v2063 = vpop.f32.mrf.mxu0
    %v2064 = vadd.f32 %v1961, %v2063
    %v2065 = vpop.f32.mrf.mxu0
    %2066 = vmatprep.mubr.f32.mxu0 0.0
    %2067 = vmatmul.mubr.f32.gmra.mxu0 %v1639
    %v2068 = vpop.f32.mrf.mxu0
    %v2069 = vadd.f32 %v1961, %v2068
    %v2070 = vpop.f32.mrf.mxu0
    %2071 = vmatprep.mubr.f32.mxu0 0.0
    %2072 = vmatmul.mubr.f32.gmra.mxu0 %v1641
    %v2073 = vpop.f32.mrf.mxu0
    %v2074 = vadd.f32 %v1961, %v2073
    %v2075 = vpop.f32.mrf.mxu0
    %2076 = vmatprep.mubr.f32.mxu0 0.0
    %2077 = vmatmul.mubr.f32.gmra.mxu0 %v1643
    %v2078 = vpop.f32.mrf.mxu0
    %v2079 = vadd.f32 %v1961, %v2078
    %v2080 = vpop.f32.mrf.mxu0
    %2081 = vmatprep.mubr.f32.mxu0 0.0
    %2082 = vmatmul.mubr.f32.gmra.mxu0 %v1645
    %v2083 = vpop.f32.mrf.mxu0
    %v2084 = vadd.f32 %v1961, %v2083
    %v2085 = vpop.f32.mrf.mxu0
    %2086 = vmatprep.mubr.f32.mxu0 0.0
    %2087 = vmatmul.mubr.f32.gmra.mxu0 %v1647
    %v2088 = vpop.f32.mrf.mxu0
    %v2089 = vadd.f32 %v1961, %v2088
    %v2090 = vpop.f32.mrf.mxu0
    %2091 = vmatprep.mubr.f32.mxu0 0.0
    %2092 = vmatmul.mubr.f32.gmra.mxu0 %v1649
    %v2093 = vpop.f32.mrf.mxu0
    %v2094 = vadd.f32 %v1961, %v2093
    %v2095 = vpop.f32.mrf.mxu0
    %2096 = vmatprep.mubr.f32.mxu0 0.0
    %2097 = vmatmul.mubr.f32.gmra.mxu0 %v1651
    %v2098 = vpop.f32.mrf.mxu0
    %v2099 = vadd.f32 %v1961, %v2098
    %v2100 = vpop.f32.mrf.mxu0
    %2101 = vmatprep.mubr.f32.mxu0 0.0
    %2102 = vmatmul.mubr.f32.gmra.mxu0 %v1653
    %v2103 = vpop.f32.mrf.mxu0
    %v2104 = vadd.f32 %v1961, %v2103
    %v2105 = vpop.f32.mrf.mxu0
    %2106 = vmatprep.mubr.f32.mxu0 0.0
    %2107 = vmatmul.mubr.f32.gmra.mxu0 %v1655
    %v2108 = vpop.f32.mrf.mxu0
    %v2109 = vadd.f32 %v1961, %v2108
    %v2110 = vpop.f32.mrf.mxu0
    %2111 = vmatprep.mubr.f32.mxu0 0.0
    %2112 = vmatmul.mubr.f32.gmra.mxu0 %v1657
    %v2113 = vpop.f32.mrf.mxu0
    %v2114 = vadd.f32 %v1961, %v2113
    %v2115 = vpop.f32.mrf.mxu0
    %2116 = vmatprep.mubr.f32.mxu0 0.0
    %2117 = vmatmul.mubr.f32.gmra.mxu0 %v1659
    %v2118 = vpop.f32.mrf.mxu0
    %v2119 = vadd.f32 %v1961, %v2118
    %v2120 = vpop.f32.mrf.mxu0
    %2121 = vmatprep.mubr.f32.mxu0 0.0
    %2122 = vmatmul.mubr.f32.gmra.mxu0 %v1661
    %v2123 = vpop.f32.mrf.mxu0
    %v2124 = vadd.f32 %v1961, %v2123
    %v2125 = vpop.f32.mrf.mxu0
    %2126 = vmatprep.mubr.f32.mxu0 0.0
    %2127 = vmatmul.mubr.f32.gmra.mxu0 %v1663
    %v2128 = vpop.f32.mrf.mxu0
    %v2129 = vadd.f32 %v1961, %v2128
    %v2130 = vpop.f32.mrf.mxu0
    %2131 = vmatprep.mubr.f32.mxu0 0.0
    %2132 = vmatmul.mubr.f32.gmra.mxu0 %v1665
    %v2133 = vpop.f32.mrf.mxu0
    %v2134 = vadd.f32 %v1961, %v2133
    %v2135 = vpop.f32.mrf.mxu0
    %2136 = vmatprep.mubr.f32.mxu0 0.0
    %2137 = vmatmul.mubr.f32.gmra.mxu0 %v1667
    %v2138 = vpop.f32.mrf.mxu0
    %v2139 = vadd.f32 %v1961, %v2138
    %v2140 = vpop.f32.mrf.mxu0
    %2141 = vmatprep.mubr.f32.mxu0 0.0
    %2142 = vmatmul.mubr.f32.gmra.mxu0 %v1669
    %v2143 = vpop.f32.mrf.mxu0
    %v2144 = vadd.f32 %v1961, %v2143
    %v2145 = vpop.f32.mrf.mxu0
    %2146 = vmatprep.mubr.f32.mxu0 0.0
    %2147 = vmatmul.mubr.f32.gmra.mxu0 %v1671
    %v2148 = vpop.f32.mrf.mxu0
    %v2149 = vadd.f32 %v1961, %v2148
    %v2150 = vpop.f32.mrf.mxu0
    %2151 = vmatprep.mubr.f32.mxu0 0.0
    %2152 = vmatmul.mubr.f32.gmra.mxu0 %v1673
    %v2153 = vpop.f32.mrf.mxu0
    %v2154 = vadd.f32 %v1961, %v2153
    %v2155 = vpop.f32.mrf.mxu0
    %2156 = vmatprep.mubr.f32.mxu0 0.0
    %2157 = vmatmul.mubr.f32.gmra.mxu0 %v1675
    %v2158 = vpop.f32.mrf.mxu0
    %v2159 = vadd.f32 %v1961, %v2158
    %v2160 = vpop.f32.mrf.mxu0
    %2161 = vmatprep.mubr.f32.mxu0 0.0
    %2162 = vmatmul.mubr.f32.gmra.mxu0 %v1677
    %v2163 = vpop.f32.mrf.mxu0
    %v2164 = vadd.f32 %v1961, %v2163
    %v2165 = vpop.f32.mrf.mxu0
    %2166 = vmatprep.mubr.f32.mxu0 0.0
    %2167 = vmatmul.mubr.f32.gmra.mxu0 %v1679
    %v2168 = vpop.f32.mrf.mxu0
    %v2169 = vadd.f32 %v1961, %v2168
    %v2170 = vpop.f32.mrf.mxu0
    %2171 = vmatprep.mubr.f32.mxu0 0.0
    %2172 = vmatmul.mubr.f32.gmra.mxu0 %v1681
    %v2173 = vpop.f32.mrf.mxu0
    %v2174 = vadd.f32 %v1961, %v2173
    %v2175 = vpop.f32.mrf.mxu0
    %2176 = vmatprep.mubr.f32.mxu0 0.0
    %2177 = vmatmul.mubr.f32.gmra.mxu0 %v1683
    %v2178 = vpop.f32.mrf.mxu0
    %v2179 = vadd.f32 %v1961, %v2178
    %v2180 = vpop.f32.mrf.mxu0
    %2181 = vmatprep.mubr.f32.mxu0 0.0
    %2182 = vmatmul.mubr.f32.gmra.mxu0 %v1685
    %v2183 = vpop.f32.mrf.mxu0
    %v2184 = vadd.f32 %v1961, %v2183
    %v2185 = vpop.f32.mrf.mxu0
    %2186 = vmatprep.mubr.f32.mxu0 0.0
    %2187 = vmatmul.mubr.f32.gmra.mxu0 %v1687
    %v2188 = vpop.f32.mrf.mxu0
    %v2189 = vadd.f32 %v1961, %v2188
    %v2190 = vpop.f32.mrf.mxu0
    %2191 = vmatprep.mubr.f32.mxu0 0.0
    %2192 = vmatmul.mubr.f32.gmra.mxu0 %v1689
    %v2193 = vpop.f32.mrf.mxu0
    %v2194 = vadd.f32 %v1961, %v2193
    %v2195 = vpop.f32.mrf.mxu0
    %2196 = vmatprep.mubr.f32.mxu0 0.0
    %2197 = vmatmul.mubr.f32.gmra.mxu0 %v1691
    %v2198 = vpop.f32.mrf.mxu0
    %v2199 = vadd.f32 %v1961, %v2198
    %v2200 = vpop.f32.mrf.mxu0
    %2201 = vmatprep.mubr.f32.mxu0 0.0
    %2202 = vmatmul.mubr.f32.gmra.mxu0 %v1693
    %v2203 = vpop.f32.mrf.mxu0
    %v2204 = vadd.f32 %v1961, %v2203
    %v2205 = vpop.f32.mrf.mxu0
    %2206 = vmatprep.mubr.f32.mxu0 0.0
    %2207 = vmatmul.mubr.f32.gmra.mxu0 %v1695
    %v2208 = vpop.f32.mrf.mxu0
    %v2209 = vadd.f32 %v1961, %v2208
    %v2210 = vpop.f32.mrf.mxu0
    %2211 = vmatprep.mubr.f32.mxu0 0.0
    %2212 = vmatmul.mubr.f32.gmra.mxu0 %v1697
    %v2213 = vpop.f32.mrf.mxu0
    %v2214 = vadd.f32 %v1961, %v2213
    %v2215 = vpop.f32.mrf.mxu0
    %2216 = vmatprep.mubr.f32.mxu0 0.0
    %2217 = vmatmul.mubr.f32.gmra.mxu0 %v1699
    %v2218 = vpop.f32.mrf.mxu0
    %v2219 = vadd.f32 %v1961, %v2218
    %v2220 = vpop.f32.mrf.mxu0
    %2221 = vmatprep.mubr.f32.mxu0 0.0
    %2222 = vmatmul.mubr.f32.gmra.mxu0 %v1701
    %v2223 = vpop.f32.mrf.mxu0
    %v2224 = vadd.f32 %v1961, %v2223
    %v2225 = vpop.f32.mrf.mxu0
    %2226 = vmatprep.mubr.f32.mxu0 0.0
    %2227 = vmatmul.mubr.f32.gmra.mxu0 %v1703
    %v2228 = vpop.f32.mrf.mxu0
    %v2229 = vadd.f32 %v1961, %v2228
    %v2230 = vpop.f32.mrf.mxu0
    %2231 = vmatprep.mubr.f32.mxu0 0.0
    %2232 = vmatmul.mubr.f32.gmra.mxu0 %v1705
    %v2233 = vpop.f32.mrf.mxu0
    %v2234 = vadd.f32 %v1961, %v2233
    %v2235 = vpop.f32.mrf.mxu0
    %2236 = vmatprep.mubr.f32.mxu0 0.0
    %2237 = vmatmul.mubr.f32.gmra.mxu0 %v1707
    %v2238 = vpop.f32.mrf.mxu0
    %v2239 = vadd.f32 %v1961, %v2238
    %v2240 = vpop.f32.mrf.mxu0
    %2241 = vmatprep.mubr.f32.mxu0 0.0
    %2242 = vmatmul.mubr.f32.gmra.mxu0 %v1709
    %v2243 = vpop.f32.mrf.mxu0
    %v2244 = vadd.f32 %v1961, %v2243
    %v2245 = vpop.f32.mrf.mxu0
    %2246 = vmatprep.mubr.f32.mxu0 0.0
    %2247 = vmatmul.mubr.f32.gmra.mxu0 %v1711
    %v2248 = vpop.f32.mrf.mxu0
    %v2249 = vadd.f32 %v1961, %v2248
    %v2250 = vpop.f32.mrf.mxu0
    %2251 = vmatprep.mubr.f32.mxu0 0.0
    %2252 = vmatmul.mubr.f32.gmra.mxu0 %v1713
    %v2253 = vpop.f32.mrf.mxu0
    %v2254 = vadd.f32 %v1961, %v2253
    %v2255 = vpop.f32.mrf.mxu0
    %2256 = vmatprep.mubr.f32.mxu0 0.0
    %2257 = vmatmul.mubr.f32.gmra.mxu0 %v1715
    %v2258 = vpop.f32.mrf.mxu0
    %v2259 = vadd.f32 %v1961, %v2258
    %v2260 = vpop.f32.mrf.mxu0
    %2261 = vmatprep.mubr.f32.mxu0 0.0
    %2262 = vmatmul.mubr.f32.gmra.mxu0 %v1717
    %v2263 = vpop.f32.mrf.mxu0
    %v2264 = vadd.f32 %v1961, %v2263
    %v2265 = vpop.f32.mrf.mxu0
    %2266 = vmatprep.mubr.f32.mxu0 0.0
    %2267 = vmatmul.mubr.f32.gmra.mxu0 %v1719
    %v2268 = vpop.f32.mrf.mxu0
    %v2269 = vadd.f32 %v1961, %v2268
    %v2270 = vpop.f32.mrf.mxu0
    %2271 = vmatprep.mubr.f32.mxu0 0.0
    %2272 = vmatmul.mubr.f32.gmra.mxu0 %v1721
    %v2273 = vpop.f32.mrf.mxu0
    %v2274 = vadd.f32 %v1961, %v2273
    %v2275 = vpop.f32.mrf.mxu0
    %2276 = vmatprep.mubr.f32.mxu0 0.0
    %2277 = vmatmul.mubr.f32.gmra.mxu0 %v1723
    %v2278 = vpop.f32.mrf.mxu0
    %v2279 = vadd.f32 %v1961, %v2278
    %v2280 = vpop.f32.mrf.mxu0
    %2281 = vmatprep.mubr.f32.mxu0 0.0
    %2282 = vmatmul.mubr.f32.gmra.mxu0 %v1725
    %v2283 = vpop.f32.mrf.mxu0
    %v2284 = vadd.f32 %v1961, %v2283
    %v2285 = vpop.f32.mrf.mxu0
    %2286 = vmatprep.mubr.f32.mxu0 0.0
    %2287 = vmatmul.mubr.f32.gmra.mxu0 %v1727
    %v2288 = vpop.f32.mrf.mxu0
    %v2289 = vadd.f32 %v1961, %v2288
    %v2290 = vpop.f32.mrf.mxu0
    %2291 = vmatprep.mubr.f32.mxu0 0.0
    %2292 = vmatmul.mubr.f32.gmra.mxu0 %v1729
    %v2293 = vpop.f32.mrf.mxu0
    %v2294 = vadd.f32 %v1961, %v2293
    %v2295 = vpop.f32.mrf.mxu0
    %2296 = vmatprep.mubr.f32.mxu0 0.0
    %2297 = vmatmul.mubr.f32.gmra.mxu0 %v1731
    %v2298 = vpop.f32.mrf.mxu0
    %v2299 = vadd.f32 %v1961, %v2298
    %v2300 = vpop.f32.mrf.mxu0
    %2301 = vmatprep.mubr.f32.mxu0 0.0
    %2302 = vmatmul.mubr.f32.gmra.mxu0 %v1733
    %v2303 = vpop.f32.mrf.mxu0
    %v2304 = vadd.f32 %v1961, %v2303
    %v2305 = vpop.f32.mrf.mxu0
    %2306 = vmatprep.mubr.f32.mxu0 0.0
    %2307 = vmatmul.mubr.f32.gmra.mxu0 %v1735
    %v2308 = vpop.f32.mrf.mxu0
    %v2309 = vadd.f32 %v1961, %v2308
    %v2310 = vpop.f32.mrf.mxu0
    %2311 = vmatprep.mubr.f32.mxu0 0.0
    %2312 = vmatmul.mubr.f32.gmra.mxu0 %v1737
    %v2313 = vpop.f32.mrf.mxu0
    %v2314 = vadd.f32 %v1961, %v2313
    %v2315 = vpop.f32.mrf.mxu0
    %2316 = vmatprep.mubr.f32.mxu0 0.0
    %2317 = vmatmul.mubr.f32.gmra.mxu0 %v1739
    %v2318 = vpop.f32.mrf.mxu0
    %v2319 = vadd.f32 %v1961, %v2318
    %v2320 = vpop.f32.mrf.mxu0
    %2321 = vmatprep.mubr.f32.mxu0 0.0
    %2322 = vmatmul.mubr.f32.gmra.mxu0 %v1741
    %v2323 = vpop.f32.mrf.mxu0
    %v2324 = vadd.f32 %v1961, %v2323
    %v2325 = vpop.f32.mrf.mxu0
    %2326 = vmatprep.mubr.f32.mxu0 0.0
    %2327 = vmatmul.mubr.f32.gmra.mxu0 %v1743
    %v2328 = vpop.f32.mrf.mxu0
    %v2329 = vadd.f32 %v1961, %v2328
    %v2330 = vpop.f32.mrf.mxu0
    %2331 = vmatprep.mubr.f32.mxu0 0.0
    %2332 = vmatmul.mubr.f32.gmra.mxu0 %v1745
    %v2333 = vpop.f32.mrf.mxu0
    %v2334 = vadd.f32 %v1961, %v2333
    %v2335 = vpop.f32.mrf.mxu0
    %2336 = vmatprep.mubr.f32.mxu0 0.0
    %2337 = vmatmul.mubr.f32.gmra.mxu0 %v1747
    %v2338 = vpop.f32.mrf.mxu0
    %v2339 = vadd.f32 %v1961, %v2338
    %v2340 = vpop.f32.mrf.mxu0
    %2341 = vmatprep.mubr.f32.mxu0 0.0
    %2342 = vmatmul.mubr.f32.gmra.mxu0 %v1749
    %v2343 = vpop.f32.mrf.mxu0
    %v2344 = vadd.f32 %v1961, %v2343
    %v2345 = vpop.f32.mrf.mxu0
    %2346 = vdwg.mxu0
    %v2347 = vrcp.pop %v2029
    %v2348 = vrcp.pop %v2034
    %v2349 = vrcp.pop %v2039
    %v2350 = vrcp.pop %v2044
    %v2351 = vrcp.pop %v2049
    %v2352 = vrcp.pop %v2054
    %v2353 = vrcp.pop %v2059
    %v2354 = vrcp.pop %v2064
    %v2355 = vrcp.pop %v2069
    %v2356 = vrcp.pop %v2074
    %v2357 = vrcp.pop %v2079
    %v2358 = vrcp.pop %v2084
    %v2359 = vrcp.pop %v2089
    %v2360 = vrcp.pop %v2094
    %v2361 = vrcp.pop %v2099
    %v2362 = vrcp.pop %v2104
    %v2363 = vrcp.pop %v2109
    %v2364 = vrcp.pop %v2114
    %v2365 = vrcp.pop %v2119
    %v2366 = vrcp.pop %v2124
    %v2367 = vrcp.pop %v2129
    %v2368 = vrcp.pop %v2134
    %v2369 = vrcp.pop %v2139
    %v2370 = vrcp.pop %v2144
    %v2371 = vrcp.pop %v2149
    %v2372 = vrcp.pop %v2154
    %v2373 = vrcp.pop %v2159
    %v2374 = vrcp.pop %v2164
    %v2375 = vrcp.pop %v2169
    %v2376 = vrcp.pop %v2174
    %v2377 = vrcp.pop %v2179
    %v2378 = vrcp.pop %v2184
    %v2379 = vrcp.pop %v2189
    %v2380 = vrcp.pop %v2194
    %v2381 = vrcp.pop %v2199
    %v2382 = vrcp.pop %v2204
    %v2383 = vrcp.pop %v2209
    %v2384 = vrcp.pop %v2214
    %v2385 = vrcp.pop %v2219
    %v2386 = vrcp.pop %v2224
    %v2387 = vrcp.pop %v2229
    %v2388 = vrcp.pop %v2234
    %v2389 = vrcp.pop %v2239
    %v2390 = vrcp.pop %v2244
    %v2391 = vrcp.pop %v2249
    %v2392 = vrcp.pop %v2254
    %v2393 = vrcp.pop %v2259
    %v2394 = vrcp.pop %v2264
    %v2395 = vrcp.pop %v2269
    %v2396 = vrcp.pop %v2274
    %v2397 = vrcp.pop %v2279
    %v2398 = vrcp.pop %v2284
    %v2399 = vrcp.pop %v2289
    %v2400 = vrcp.pop %v2294
    %v2401 = vrcp.pop %v2299
    %v2402 = vrcp.pop %v2304
    %v2403 = vrcp.pop %v2309
    %v2404 = vrcp.pop %v2314
    %v2405 = vrcp.pop %v2319
    %v2406 = vrcp.pop %v2324
    %v2407 = vrcp.pop %v2329
    %v2408 = vrcp.pop %v2334
    %v2409 = vrcp.pop %v2339
    %v2410 = vrcp.pop %v2344
    %v2411 = vmul.f32 %v1623, %v2347
    %v2412 = vmul.f32 %v1625, %v2348
    %v2413 = vmul.f32 %v1627, %v2349
    %v2414 = vmul.f32 %v1629, %v2350
    %v2415 = vmul.f32 %v1631, %v2351
    %v2416 = vmul.f32 %v1633, %v2352
    %v2417 = vmul.f32 %v1635, %v2353
    %v2418 = vmul.f32 %v1637, %v2354
    %v2419 = vmul.f32 %v1639, %v2355
    %v2420 = vmul.f32 %v1641, %v2356
    %v2421 = vmul.f32 %v1643, %v2357
    %v2422 = vmul.f32 %v1645, %v2358
    %v2423 = vmul.f32 %v1647, %v2359
    %v2424 = vmul.f32 %v1649, %v2360
    %v2425 = vmul.f32 %v1651, %v2361
    %v2426 = vmul.f32 %v1653, %v2362
    %v2427 = vmul.f32 %v1655, %v2363
    %v2428 = vmul.f32 %v1657, %v2364
    %v2429 = vmul.f32 %v1659, %v2365
    %v2430 = vmul.f32 %v1661, %v2366
    %v2431 = vmul.f32 %v1663, %v2367
    %v2432 = vmul.f32 %v1665, %v2368
    %v2433 = vmul.f32 %v1667, %v2369
    %v2434 = vmul.f32 %v1669, %v2370
    %v2435 = vmul.f32 %v1671, %v2371
    %v2436 = vmul.f32 %v1673, %v2372
    %v2437 = vmul.f32 %v1675, %v2373
    %v2438 = vmul.f32 %v1677, %v2374
    %v2439 = vmul.f32 %v1679, %v2375
    %v2440 = vmul.f32 %v1681, %v2376
    %v2441 = vmul.f32 %v1683, %v2377
    %v2442 = vmul.f32 %v1685, %v2378
    %v2443 = vmul.f32 %v1687, %v2379
    %v2444 = vmul.f32 %v1689, %v2380
    %v2445 = vmul.f32 %v1691, %v2381
    %v2446 = vmul.f32 %v1693, %v2382
    %v2447 = vmul.f32 %v1695, %v2383
    %v2448 = vmul.f32 %v1697, %v2384
    %v2449 = vmul.f32 %v1699, %v2385
    %v2450 = vmul.f32 %v1701, %v2386
    %v2451 = vmul.f32 %v1703, %v2387
    %v2452 = vmul.f32 %v1705, %v2388
    %v2453 = vmul.f32 %v1707, %v2389
    %v2454 = vmul.f32 %v1709, %v2390
    %v2455 = vmul.f32 %v1711, %v2391
    %v2456 = vmul.f32 %v1713, %v2392
    %v2457 = vmul.f32 %v1715, %v2393
    %v2458 = vmul.f32 %v1717, %v2394
    %v2459 = vmul.f32 %v1719, %v2395
    %v2460 = vmul.f32 %v1721, %v2396
    %v2461 = vmul.f32 %v1723, %v2397
    %v2462 = vmul.f32 %v1725, %v2398
    %v2463 = vmul.f32 %v1727, %v2399
    %v2464 = vmul.f32 %v1729, %v2400
    %v2465 = vmul.f32 %v1731, %v2401
    %v2466 = vmul.f32 %v1733, %v2402
    %v2467 = vmul.f32 %v1735, %v2403
    %v2468 = vmul.f32 %v1737, %v2404
    %v2469 = vmul.f32 %v1739, %v2405
    %v2470 = vmul.f32 %v1741, %v2406
    %v2471 = vmul.f32 %v1743, %v2407
    %v2472 = vmul.f32 %v1745, %v2408
    %v2473 = vmul.f32 %v1747, %v2409
    %v2474 = vmul.f32 %v1749, %v2410
    %v2475 = vsel %vm1301, %v2411, 0.0
    %v2476 = vsel %vm1301, %v2412, 0.0
    %v2477 = vsel %vm1301, %v2413, 0.0
    %v2478 = vsel %vm1301, %v2414, 0.0
    %v2479 = vsel %vm1301, %v2415, 0.0
    %v2480 = vsel %vm1301, %v2416, 0.0
    %v2481 = vsel %vm1301, %v2417, 0.0
    %v2482 = vsel %vm1301, %v2418, 0.0
    %v2483 = vsel %vm1301, %v2419, 0.0
    %v2484 = vsel %vm1301, %v2420, 0.0
    %v2485 = vsel %vm1301, %v2421, 0.0
    %v2486 = vsel %vm1301, %v2422, 0.0
    %v2487 = vsel %vm1301, %v2423, 0.0
    %v2488 = vsel %vm1301, %v2424, 0.0
    %v2489 = vsel %vm1301, %v2425, 0.0
    %v2490 = vsel %vm1301, %v2426, 0.0
    %v2491 = vsel %vm1301, %v2427, 0.0
    %v2492 = vsel %vm1301, %v2428, 0.0
    %v2493 = vsel %vm1301, %v2429, 0.0
    %v2494 = vsel %vm1301, %v2430, 0.0
    %v2495 = vsel %vm1301, %v2431, 0.0
    %v2496 = vsel %vm1301, %v2432, 0.0
    %v2497 = vsel %vm1301, %v2433, 0.0
    %v2498 = vsel %vm1301, %v2434, 0.0
    %v2499 = vsel %vm1301, %v2435, 0.0
    %v2500 = vsel %vm1301, %v2436, 0.0
    %v2501 = vsel %vm1301, %v2437, 0.0
    %v2502 = vsel %vm1301, %v2438, 0.0
    %v2503 = vsel %vm1301, %v2439, 0.0
    %v2504 = vsel %vm1301, %v2440, 0.0
    %v2505 = vsel %vm1301, %v2441, 0.0
    %v2506 = vsel %vm1301, %v2442, 0.0
    %v2507 = vsel %vm1301, %v2443, 0.0
    %v2508 = vsel %vm1301, %v2444, 0.0
    %v2509 = vsel %vm1301, %v2445, 0.0
    %v2510 = vsel %vm1301, %v2446, 0.0
    %v2511 = vsel %vm1301, %v2447, 0.0
    %v2512 = vsel %vm1301, %v2448, 0.0
    %v2513 = vsel %vm1301, %v2449, 0.0
    %v2514 = vsel %vm1301, %v2450, 0.0
    %v2515 = vsel %vm1301, %v2451, 0.0
    %v2516 = vsel %vm1301, %v2452, 0.0
    %v2517 = vsel %vm1301, %v2453, 0.0
    %v2518 = vsel %vm1301, %v2454, 0.0
    %v2519 = vsel %vm1301, %v2455, 0.0
    %v2520 = vsel %vm1301, %v2456, 0.0
    %v2521 = vsel %vm1301, %v2457, 0.0
    %v2522 = vsel %vm1301, %v2458, 0.0
    %v2523 = vsel %vm1301, %v2459, 0.0
    %v2524 = vsel %vm1301, %v2460, 0.0
    %v2525 = vsel %vm1301, %v2461, 0.0
    %v2526 = vsel %vm1301, %v2462, 0.0
    %v2527 = vsel %vm1301, %v2463, 0.0
    %v2528 = vsel %vm1301, %v2464, 0.0
    %v2529 = vsel %vm1301, %v2465, 0.0
    %v2530 = vsel %vm1301, %v2466, 0.0
    %v2531 = vsel %vm1301, %v2467, 0.0
    %v2532 = vsel %vm1301, %v2468, 0.0
    %v2533 = vsel %vm1301, %v2469, 0.0
    %v2534 = vsel %vm1301, %v2470, 0.0
    %v2535 = vsel %vm1301, %v2471, 0.0
    %v2536 = vsel %vm1301, %v2472, 0.0
    %v2537 = vsel %vm1301, %v2473, 0.0
    %v2538 = vsel %vm1301, %v2474, 0.0
    %v2539 = vlaneseq
    %v2540 = vshrl.u32 %v2539, 7
    %v2541 = vsub.s32 1, %v2540
    %v2542 = vrot.slane %v1296, %v2541
    %vm2543 = vcmp.eq.s32.totalorder %v2542, 1
    %v2544 = vsel %vm2543, %v1623, %v2475
    %v2545 = vsel %vm2543, %v1625, %v2476
    %v2546 = vsel %vm2543, %v1627, %v2477
    %v2547 = vsel %vm2543, %v1629, %v2478
    %v2548 = vsel %vm2543, %v1631, %v2479
    %v2549 = vsel %vm2543, %v1633, %v2480
    %v2550 = vsel %vm2543, %v1635, %v2481
    %v2551 = vsel %vm2543, %v1637, %v2482
    %v2552 = vsel %vm2543, %v1639, %v2483
    %v2553 = vsel %vm2543, %v1641, %v2484
    %v2554 = vsel %vm2543, %v1643, %v2485
    %v2555 = vsel %vm2543, %v1645, %v2486
    %v2556 = vsel %vm2543, %v1647, %v2487
    %v2557 = vsel %vm2543, %v1649, %v2488
    %v2558 = vsel %vm2543, %v1651, %v2489
    %v2559 = vsel %vm2543, %v1653, %v2490
    %v2560 = vsel %vm2543, %v1655, %v2491
    %v2561 = vsel %vm2543, %v1657, %v2492
    %v2562 = vsel %vm2543, %v1659, %v2493
    %v2563 = vsel %vm2543, %v1661, %v2494
    %v2564 = vsel %vm2543, %v1663, %v2495
    %v2565 = vsel %vm2543, %v1665, %v2496
    %v2566 = vsel %vm2543, %v1667, %v2497
    %v2567 = vsel %vm2543, %v1669, %v2498
    %v2568 = vsel %vm2543, %v1671, %v2499
    %v2569 = vsel %vm2543, %v1673, %v2500
    %v2570 = vsel %vm2543, %v1675, %v2501
    %v2571 = vsel %vm2543, %v1677, %v2502
    %v2572 = vsel %vm2543, %v1679, %v2503
    %v2573 = vsel %vm2543, %v1681, %v2504
    %v2574 = vsel %vm2543, %v1683, %v2505
    %v2575 = vsel %vm2543, %v1685, %v2506
    %v2576 = vsel %vm2543, %v1687, %v2507
    %v2577 = vsel %vm2543, %v1689, %v2508
    %v2578 = vsel %vm2543, %v1691, %v2509
    %v2579 = vsel %vm2543, %v1693, %v2510
    %v2580 = vsel %vm2543, %v1695, %v2511
    %v2581 = vsel %vm2543, %v1697, %v2512
    %v2582 = vsel %vm2543, %v1699, %v2513
    %v2583 = vsel %vm2543, %v1701, %v2514
    %v2584 = vsel %vm2543, %v1703, %v2515
    %v2585 = vsel %vm2543, %v1705, %v2516
    %v2586 = vsel %vm2543, %v1707, %v2517
    %v2587 = vsel %vm2543, %v1709, %v2518
    %v2588 = vsel %vm2543, %v1711, %v2519
    %v2589 = vsel %vm2543, %v1713, %v2520
    %v2590 = vsel %vm2543, %v1715, %v2521
    %v2591 = vsel %vm2543, %v1717, %v2522
    %v2592 = vsel %vm2543, %v1719, %v2523
    %v2593 = vsel %vm2543, %v1721, %v2524
    %v2594 = vsel %vm2543, %v1723, %v2525
    %v2595 = vsel %vm2543, %v1725, %v2526
    %v2596 = vsel %vm2543, %v1727, %v2527
    %v2597 = vsel %vm2543, %v1729, %v2528
    %v2598 = vsel %vm2543, %v1731, %v2529
    %v2599 = vsel %vm2543, %v1733, %v2530
    %v2600 = vsel %vm2543, %v1735, %v2531
    %v2601 = vsel %vm2543, %v1737, %v2532
    %v2602 = vsel %vm2543, %v1739, %v2533
    %v2603 = vsel %vm2543, %v1741, %v2534
    %v2604 = vsel %vm2543, %v1743, %v2535
    %v2605 = vsel %vm2543, %v1745, %v2536
    %v2606 = vsel %vm2543, %v1747, %v2537
    %v2607 = vsel %vm2543, %v1749, %v2538
    %v2608 = vlaneseq
    %v2609 = vshrl.u32 %v2608, 7
    %v2610 = vsub.s32 0, %v2609
    %v2611 = vrot.slane %v1296, %v2610
    %vm2612 = vcmp.eq.s32.totalorder %v2611, 1
    %v2613 = vsel %vm2612, %v1878, %v2544
    %v2614 = vsel %vm2612, %v1879, %v2545
    %v2615 = vsel %vm2612, %v1880, %v2546
    %v2616 = vsel %vm2612, %v1881, %v2547
    %v2617 = vsel %vm2612, %v1882, %v2548
    %v2618 = vsel %vm2612, %v1883, %v2549
    %v2619 = vsel %vm2612, %v1884, %v2550
    %v2620 = vsel %vm2612, %v1885, %v2551
    %v2621 = vsel %vm2612, %v1886, %v2552
    %v2622 = vsel %vm2612, %v1887, %v2553
    %v2623 = vsel %vm2612, %v1888, %v2554
    %v2624 = vsel %vm2612, %v1889, %v2555
    %v2625 = vsel %vm2612, %v1890, %v2556
    %v2626 = vsel %vm2612, %v1891, %v2557
    %v2627 = vsel %vm2612, %v1892, %v2558
    %v2628 = vsel %vm2612, %v1893, %v2559
    %v2629 = vsel %vm2612, %v1894, %v2560
    %v2630 = vsel %vm2612, %v1895, %v2561
    %v2631 = vsel %vm2612, %v1896, %v2562
    %v2632 = vsel %vm2612, %v1897, %v2563
    %v2633 = vsel %vm2612, %v1898, %v2564
    %v2634 = vsel %vm2612, %v1899, %v2565
    %v2635 = vsel %vm2612, %v1900, %v2566
    %v2636 = vsel %vm2612, %v1901, %v2567
    %v2637 = vsel %vm2612, %v1902, %v2568
    %v2638 = vsel %vm2612, %v1903, %v2569
    %v2639 = vsel %vm2612, %v1904, %v2570
    %v2640 = vsel %vm2612, %v1905, %v2571
    %v2641 = vsel %vm2612, %v1906, %v2572
    %v2642 = vsel %vm2612, %v1907, %v2573
    %v2643 = vsel %vm2612, %v1908, %v2574
    %v2644 = vsel %vm2612, %v1909, %v2575
    %v2645 = vsel %vm2612, %v1910, %v2576
    %v2646 = vsel %vm2612, %v1911, %v2577
    %v2647 = vsel %vm2612, %v1912, %v2578
    %v2648 = vsel %vm2612, %v1913, %v2579
    %v2649 = vsel %vm2612, %v1914, %v2580
    %v2650 = vsel %vm2612, %v1915, %v2581
    %v2651 = vsel %vm2612, %v1916, %v2582
    %v2652 = vsel %vm2612, %v1917, %v2583
    %v2653 = vsel %vm2612, %v1918, %v2584
    %v2654 = vsel %vm2612, %v1919, %v2585
    %v2655 = vsel %vm2612, %v1920, %v2586
    %v2656 = vsel %vm2612, %v1921, %v2587
    %v2657 = vsel %vm2612, %v1922, %v2588
    %v2658 = vsel %vm2612, %v1923, %v2589
    %v2659 = vsel %vm2612, %v1924, %v2590
    %v2660 = vsel %vm2612, %v1925, %v2591
    %v2661 = vsel %vm2612, %v1926, %v2592
    %v2662 = vsel %vm2612, %v1927, %v2593
    %v2663 = vsel %vm2612, %v1928, %v2594
    %v2664 = vsel %vm2612, %v1929, %v2595
    %v2665 = vsel %vm2612, %v1930, %v2596
    %v2666 = vsel %vm2612, %v1931, %v2597
    %v2667 = vsel %vm2612, %v1932, %v2598
    %v2668 = vsel %vm2612, %v1933, %v2599
    %v2669 = vsel %vm2612, %v1934, %v2600
    %v2670 = vsel %vm2612, %v1935, %v2601
    %v2671 = vsel %vm2612, %v1936, %v2602
    %v2672 = vsel %vm2612, %v1937, %v2603
    %v2673 = vsel %vm2612, %v1938, %v2604
    %v2674 = vsel %vm2612, %v1939, %v2605
    %v2675 = vsel %vm2612, %v1940, %v2606
    %v2676 = vsel %vm2612, %v1941, %v2607
    %2677 = vst [vmem:[#allocation11] sm:$0xff] %v2613
    %2678 = vst [vmem:[#allocation11 + $0x8] sm:$0xff] %v2614
    %2679 = vst [vmem:[#allocation11 + $0x10] sm:$0xff] %v2615
    %2680 = vst [vmem:[#allocation11 + $0x18] sm:$0xff] %v2616
    %2681 = vst [vmem:[#allocation11 + $0x20] sm:$0xff] %v2617
    %2682 = vst [vmem:[#allocation11 + $0x28] sm:$0xff] %v2618
    %2683 = vst [vmem:[#allocation11 + $0x30] sm:$0xff] %v2619
    %2684 = vst [vmem:[#allocation11 + $0x38] sm:$0xff] %v2620
    %2685 = vst [vmem:[#allocation11 + $0x40] sm:$0xff] %v2621
    %2686 = vst [vmem:[#allocation11 + $0x48] sm:$0xff] %v2622
    %2687 = vst [vmem:[#allocation11 + $0x50] sm:$0xff] %v2623
    %2688 = vst [vmem:[#allocation11 + $0x58] sm:$0xff] %v2624
    %2689 = vst [vmem:[#allocation11 + $0x60] sm:$0xff] %v2625
    %2690 = vst [vmem:[#allocation11 + $0x68] sm:$0xff] %v2626
    %2691 = vst [vmem:[#allocation11 + $0x70] sm:$0xff] %v2627
    %2692 = vst [vmem:[#allocation11 + $0x78] sm:$0xff] %v2628
    %2693 = vst [vmem:[#allocation11 + $0x80] sm:$0xff] %v2629
    %2694 = vst [vmem:[#allocation11 + $0x88] sm:$0xff] %v2630
    %2695 = vst [vmem:[#allocation11 + $0x90] sm:$0xff] %v2631
    %2696 = vst [vmem:[#allocation11 + $0x98] sm:$0xff] %v2632
    %2697 = vst [vmem:[#allocation11 + $0xa0] sm:$0xff] %v2633
    %2698 = vst [vmem:[#allocation11 + $0xa8] sm:$0xff] %v2634
    %2699 = vst [vmem:[#allocation11 + $0xb0] sm:$0xff] %v2635
    %2700 = vst [vmem:[#allocation11 + $0xb8] sm:$0xff] %v2636
    %2701 = vst [vmem:[#allocation11 + $0xc0] sm:$0xff] %v2637
    %2702 = vst [vmem:[#allocation11 + $0xc8] sm:$0xff] %v2638
    %2703 = vst [vmem:[#allocation11 + $0xd0] sm:$0xff] %v2639
    %2704 = vst [vmem:[#allocation11 + $0xd8] sm:$0xff] %v2640
    %2705 = vst [vmem:[#allocation11 + $0xe0] sm:$0xff] %v2641
    %2706 = vst [vmem:[#allocation11 + $0xe8] sm:$0xff] %v2642
    %2707 = vst [vmem:[#allocation11 + $0xf0] sm:$0xff] %v2643
    %2708 = vst [vmem:[#allocation11 + $0xf8] sm:$0xff] %v2644
    %2709 = vst [vmem:[#allocation11 + $0x100] sm:$0xff] %v2645
    %2710 = vst [vmem:[#allocation11 + $0x108] sm:$0xff] %v2646
    %2711 = vst [vmem:[#allocation11 + $0x110] sm:$0xff] %v2647
    %2712 = vst [vmem:[#allocation11 + $0x118] sm:$0xff] %v2648
    %2713 = vst [vmem:[#allocation11 + $0x120] sm:$0xff] %v2649
    %2714 = vst [vmem:[#allocation11 + $0x128] sm:$0xff] %v2650
    %2715 = vst [vmem:[#allocation11 + $0x130] sm:$0xff] %v2651
    %2716 = vst [vmem:[#allocation11 + $0x138] sm:$0xff] %v2652
    %2717 = vst [vmem:[#allocation11 + $0x140] sm:$0xff] %v2653
    %2718 = vst [vmem:[#allocation11 + $0x148] sm:$0xff] %v2654
    %2719 = vst [vmem:[#allocation11 + $0x150] sm:$0xff] %v2655
    %2720 = vst [vmem:[#allocation11 + $0x158] sm:$0xff] %v2656
    %2721 = vst [vmem:[#allocation11 + $0x160] sm:$0xff] %v2657
    %2722 = vst [vmem:[#allocation11 + $0x168] sm:$0xff] %v2658
    %2723 = vst [vmem:[#allocation11 + $0x170] sm:$0xff] %v2659
    %2724 = vst [vmem:[#allocation11 + $0x178] sm:$0xff] %v2660
    %2725 = vst [vmem:[#allocation11 + $0x180] sm:$0xff] %v2661
    %2726 = vst [vmem:[#allocation11 + $0x188] sm:$0xff] %v2662
    %2727 = vst [vmem:[#allocation11 + $0x190] sm:$0xff] %v2663
    %2728 = vst [vmem:[#allocation11 + $0x198] sm:$0xff] %v2664
    %2729 = vst [vmem:[#allocation11 + $0x1a0] sm:$0xff] %v2665
    %2730 = vst [vmem:[#allocation11 + $0x1a8] sm:$0xff] %v2666
    %2731 = vst [vmem:[#allocation11 + $0x1b0] sm:$0xff] %v2667
    %2732 = vst [vmem:[#allocation11 + $0x1b8] sm:$0xff] %v2668
    %2733 = vst [vmem:[#allocation11 + $0x1c0] sm:$0xff] %v2669
    %2734 = vst [vmem:[#allocation11 + $0x1c8] sm:$0xff] %v2670
    %2735 = vst [vmem:[#allocation11 + $0x1d0] sm:$0xff] %v2671
    %2736 = vst [vmem:[#allocation11 + $0x1d8] sm:$0xff] %v2672
    %2737 = vst [vmem:[#allocation11 + $0x1e0] sm:$0xff] %v2673
    %2738 = vst [vmem:[#allocation11 + $0x1e8] sm:$0xff] %v2674
    %2739 = vst [vmem:[#allocation11 + $0x1f0] sm:$0xff] %v2675
    %2740 = vst [vmem:[#allocation11 + $0x1f8] sm:$0xff] %v2676
    // Predicated region
    $region50: #{tpu_custom_call.1} parent=1 // pred_check
      _
    $region51: #{tpu_custom_call.1} parent=1 // pred_check_branch
      %2742 = sbr.rel (0) target = $region53
    $region52: #{tpu_custom_call.1} parent=1 // pred_region
      %s2744 = ssub.s32 8192, 8192
      %2745 = vsyncadd [#allocation4], %s2744
      %s2746 = sshll.u32 [#allocation11], 4
      %s2747 = int_to_ptr.vmem [resolvable:$true] %s2746
      %2752 = dma.vmem_to_hbm [thread:$0]  %s2747, 8192, %s7, [#allocation4], 128, 128, 8
    $region53: #{tpu_custom_call.1} parent=1 // pred_fallthru
      _
    // Predicated region
    $region54: #{tpu_custom_call.1} parent=1 // pred_check
      _
    $region55: #{tpu_custom_call.1} parent=1 // pred_check_branch
      %2754 = sbr.rel (0) target = $region57
    $region56: #{tpu_custom_call.1} parent=1 // pred_region
      %2755 = dma.done [#allocation4], 8192
    $region57: #{tpu_custom_call.1} parent=1 // pred_fallthru
      _
    %2756 = vsyncpa [#allocation3], 1
    %2757 = vsyncpa [#allocation6], 1
    %2758 = vsyncpa [#allocation9], 1
    %2759 = vsyncpa [#allocation4], 1

</llo_original>
